<compile_context>
chip_gen: v7x
topology: tpu7x:2x2x1
jax: 0.10.0
libtpu: 0.0.40
codegen_flags: <defaults>
</compile_context>

<pallas_src>
import functools

import jax
import jax.numpy as jnp
import numpy as np
from jax.experimental import pallas as pl
from jax.experimental.pallas import tpu as pltpu


def _imha_kernel(n_head, d_head, b_blk, t, h, use_mask,
                 x_ref, wqkv_ref, bqkv_ref, wout_ref, bout_ref,
                 out_ref, attn_ref):
    qkv_dim = (2 * n_head + 1) * d_head

    # --- fused QKV projection on the stacked (b_blk*t, h) slab --------------
    x2d = x_ref[...].reshape(b_blk * t, h)                                   # (R, h)
    qkv = jnp.dot(x2d, wqkv_ref[...],
                  preferred_element_type=jnp.float32) + bqkv_ref[...]        # (R, qkv)
    qkv3 = qkv.reshape(b_blk, t, qkv_dim)                                    # (b, t, qkv)

    v = qkv3[:, :, 2 * n_head * d_head:]                                     # (b, t, dh)

    # --- causal mask built in-kernel (no HBM traffic, no (t,t) input) -------
    if use_mask:
        row = jax.lax.broadcasted_iota(jnp.int32, (t, t), 0)
        col = jax.lax.broadcasted_iota(jnp.int32, (t, t), 1)
        mask_add = jnp.where(col <= row, jnp.float32(0.0), jnp.float32(-jnp.inf))
    else:
        mask_add = None

    head_outs = []
    head_sum = jnp.zeros((b_blk, t, d_head), dtype=jnp.float32)

    # n_head is small & static: unrolled loop; each head is batched over the
    # whole batch block with 3-D (batched) einsums on the MXU.
    for n in range(n_head):
        q_n = qkv3[:, :, n * d_head:(n + 1) * d_head]                        # (b, t, dh)
        k_n = qkv3[:, :, (n_head + n) * d_head:(n_head + n + 1) * d_head]    # (b, t, dh)

        # softmax scale is already folded into the Q columns (wrapper).
        s = jnp.einsum('bqd,bkd->bqk', q_n, k_n,
                       preferred_element_type=jnp.float32)                   # (b, t, t)
        if mask_add is not None:
            s = s + mask_add                                                 # causal (-inf above diag)

        # softmax over last axis (no row is fully masked: diagonal is kept)
        s_max = jnp.max(s, axis=-1, keepdims=True)
        p = jnp.exp(s - s_max)
        denom = jnp.sum(p, axis=-1, keepdims=True)
        r = pl.reciprocal(denom, approx=True)          # EUP slot (cheap)
        r = r * (2.0 - denom * r)                      # one Newton step -> f32 accuracy
        p = p * r

        attn_n = jnp.einsum('bqk,bkd->bqd', p, v,
                            preferred_element_type=jnp.float32)              # (b, t, dh)
        head_outs.append(attn_n)
        head_sum = head_sum + attn_n

    # Lane-dense single store: (b, t, n_head*d_head).
    attn_ref[...] = jnp.concatenate(head_outs, axis=-1).astype(attn_ref.dtype)

    # Output projection on the stacked slab; 1/n_head mean folded into w_out.
    out2d = jnp.dot(head_sum.reshape(b_blk * t, d_head), wout_ref[...],
                    preferred_element_type=jnp.float32) + bout_ref[...]      # (R, h)
    out_ref[...] = out2d.reshape(b_blk, t, h).astype(out_ref.dtype)


def _choose_batch_block(bs, t, target_rows=256):
    """Largest divisor of bs keeping ~target_rows stacked rows per grid step;
    prefer >=2 grid steps (megacore / v7x 2-TC) only when the MXU still gets
    >=128 rows per step."""
    divisors = [d for d in range(1, bs + 1) if bs % d == 0]
    fitting = [d for d in divisors if d * t <= max(target_rows, t)] or [1]
    b_blk = max(fitting)
    if bs // b_blk < 2:
        two_step = [d for d in fitting if bs // d >= 2 and d * t >= 128]
        if two_step:
            b_blk = max(two_step)
    return b_blk


def interpretable_mha(x, w_qkv, b_qkv, w_out, b_out, n_head, d_head,
                      mask_future_timesteps=True):
    """x: (bs, t, h) f32.  Returns (out (bs,t,h), attn_vec (bs,n_head,t,d_head))."""
    bs, t, h = x.shape
    qkv_dim = (2 * n_head + 1) * d_head
    scale = d_head ** (-0.5)

    # Trace-time weight folding (free): softmax scale into the Q columns,
    # 1/n_head head-mean into the output projection weight.
    col_scale = jnp.concatenate([
        jnp.full((n_head * d_head,), scale, dtype=w_qkv.dtype),
        jnp.ones((qkv_dim - n_head * d_head,), dtype=w_qkv.dtype)])
    w_qkv_s = w_qkv * col_scale[None, :]
    b_qkv_s = b_qkv * col_scale[None, :]
    w_out_s = w_out * jnp.asarray(1.0 / n_head, dtype=w_out.dtype)

    b_blk = _choose_batch_block(bs, t)
    grid = (bs // b_blk,)

    kernel = functools.partial(_imha_kernel, n_head, d_head, b_blk, t, h,
                               mask_future_timesteps)

    grid_spec = pltpu.PrefetchScalarGridSpec(
        num_scalar_prefetch=0,
        grid=grid,
        in_specs=[
            pl.BlockSpec((b_blk, t, h), lambda i: (i, 0, 0)),            # x (batch block)
            pl.BlockSpec((h, qkv_dim), lambda i: (0, 0)),                # w_qkv (scaled)
            pl.BlockSpec((1, qkv_dim), lambda i: (0, 0)),                # b_qkv (scaled)
            pl.BlockSpec((d_head, h), lambda i: (0, 0)),                 # w_out (scaled)
            pl.BlockSpec((1, h), lambda i: (0, 0)),                      # b_out
        ],
        out_specs=[
            pl.BlockSpec((b_blk, t, h), lambda i: (i, 0, 0)),                    # out
            pl.BlockSpec((b_blk, t, n_head * d_head), lambda i: (i, 0, 0)),      # attn (lane-dense)
        ],
    )

    out, attn_flat = pl.pallas_call(
        kernel,
        out_shape=(
            jax.ShapeDtypeStruct((bs, t, h), jnp.float32),
            jax.ShapeDtypeStruct((bs, t, n_head * d_head), jnp.float32),
        ),
        grid_spec=grid_spec,
        compiler_params=pltpu.CompilerParams(dimension_semantics=("parallel",)),
    )(x, w_qkv_s, b_qkv_s, w_out_s, b_out)

    # Wrapper-side layout fixup: lane-dense (bs, t, nh*dh) -> module's (bs, nh, t, dh).
    attn_vec = attn_flat.reshape(bs, t, n_head, d_head).transpose(0, 2, 1, 3)
    return out, attn_vec


def _reference(x, w_qkv, b_qkv, w_out, b_out, n_head, d_head):
    bs, t, h = x.shape
    qkv = x @ w_qkv + b_qkv[0]
    q = qkv[..., : n_head * d_head].reshape(bs, t, n_head, d_head)
    k = qkv[..., n_head * d_head: 2 * n_head * d_head].reshape(bs, t, n_head, d_head)
    v = qkv[..., 2 * n_head * d_head:]
    s = jnp.einsum('bqnd,bknd->bnqk', q, k) * (d_head ** -0.5)
    mask = jnp.triu(jnp.full((t, t), -jnp.inf, dtype=jnp.float32), 1)
    s = s + mask[None, None]
    p = jax.nn.softmax(s, axis=-1)
    attn_vec = jnp.einsum('bnqk,bkd->bnqd', p, v)
    m = jnp.mean(attn_vec, axis=1)
    out = m @ w_out + b_out[0]
    return out, attn_vec


if __name__ == "__main__":
    # Small config consistent with the module:
    #   hidden_dim=32, n_head=4 -> d_head=8, example_length (= seq) = 8, batch = 2
    bs, t, hidden_dim, n_head = 2, 8, 32, 4
    d_head = hidden_dim // n_head
    qkv_dim = (2 * n_head + 1) * d_head

    key = jax.random.PRNGKey(0)
    kx, kw1, kb1, kw2, kb2 = jax.random.split(key, 5)

    x = jax.random.normal(kx, (bs, t, hidden_dim), dtype=jnp.float32)

    # Deterministic parameter init (synthetic; shapes follow the module __init__).
    w_qkv = jax.random.normal(kw1, (hidden_dim, qkv_dim), dtype=jnp.float32) * 0.1
    b_qkv = jax.random.normal(kb1, (1, qkv_dim), dtype=jnp.float32) * 0.1
    w_out = jax.random.normal(kw2, (d_head, hidden_dim), dtype=jnp.float32) * 0.1
    b_out = jax.random.normal(kb2, (1, hidden_dim), dtype=jnp.float32) * 0.1

    out, attn_vec = interpretable_mha(x, w_qkv, b_qkv, w_out, b_out, n_head, d_head)
    jax.block_until_ready(out)
    jax.block_until_ready(attn_vec)

    ref_out, ref_attn = _reference(x, w_qkv, b_qkv, w_out, b_out, n_head, d_head)
    assert np.allclose(np.asarray(out), np.asarray(ref_out), atol=1e-4, rtol=1e-4)
    assert np.allclose(np.asarray(attn_vec), np.asarray(ref_attn), atol=1e-4, rtol=1e-4)

    print("KERNEL_OK")
</pallas_src>

<mosaic_0001>
module attributes {stable_mosaic.version = 11 : i64} {
  func.func @_imha_kernel(%arg0: i32, %arg1: memref<2x8x32xf32, #tpu.memory_space<vmem>>, %arg2: memref<32x72xf32, #tpu.memory_space<vmem>>, %arg3: memref<1x72xf32, #tpu.memory_space<vmem>>, %arg4: memref<8x32xf32, #tpu.memory_space<vmem>>, %arg5: memref<1x32xf32, #tpu.memory_space<vmem>>, %arg6: memref<2x8x32xf32, #tpu.memory_space<vmem>>, %arg7: memref<2x8x32xf32, #tpu.memory_space<vmem>>) attributes {dimension_semantics = [#tpu.dimension_semantics<parallel>], iteration_bounds = array<i64: 1>, scalar_prefetch = 0 : i64, scratch_operands = 0 : i64, tpu.core_type = #tpu.core_type<tc>, window_params = [{transform_indices = @transform_0, window_bounds = array<i64: 2, 8, 32>}, {pipeline_mode = #tpu.pipeline_mode<synchronous>, transform_indices = @transform_1, window_bounds = array<i64: 32, 72>}, {pipeline_mode = #tpu.pipeline_mode<synchronous>, transform_indices = @transform_2, window_bounds = array<i64: 1, 72>}, {pipeline_mode = #tpu.pipeline_mode<synchronous>, transform_indices = @transform_3, window_bounds = array<i64: 8, 32>}, {pipeline_mode = #tpu.pipeline_mode<synchronous>, transform_indices = @transform_4, window_bounds = array<i64: 1, 32>}, {transform_indices = @transform_5, window_bounds = array<i64: 2, 8, 32>}, {transform_indices = @transform_6, window_bounds = array<i64: 2, 8, 32>}]} {
    %c0 = arith.constant 0 : index
    %c0_0 = arith.constant 0 : index
    %c0_1 = arith.constant 0 : index
    %0 = vector.load %arg1[%c0, %c0_0, %c0_1] : memref<2x8x32xf32, #tpu.memory_space<vmem>>, vector<2x8x32xf32>
    %1 = vector.shape_cast %0 : vector<2x8x32xf32> to vector<16x32xf32>
    %c0_2 = arith.constant 0 : index
    %c0_3 = arith.constant 0 : index
    %2 = vector.load %arg2[%c0_2, %c0_3] : memref<32x72xf32, #tpu.memory_space<vmem>>, vector<32x72xf32>
    %cst = arith.constant dense<0.000000e+00> : vector<16x72xf32>
    %3 = tpu.matmul %1, %2, %cst {dimension_numbers = #tpu.dot_dimension_numbers<[1], [0], [0], [1], [0, 0, 1, 1], [], []>} : vector<16x32xf32>, vector<32x72xf32>, vector<16x72xf32> -> vector<16x72xf32>
    %c0_4 = arith.constant 0 : index
    %c0_5 = arith.constant 0 : index
    %4 = vector.load %arg3[%c0_4, %c0_5] : memref<1x72xf32, #tpu.memory_space<vmem>>, vector<1x72xf32>
    %5 = vector.broadcast %4 : vector<1x72xf32> to vector<16x72xf32>
    %6 = arith.addf %3, %5 : vector<16x72xf32>
    %7 = vector.shape_cast %6 : vector<16x72xf32> to vector<2x8x72xf32>
    %8 = vector.extract_strided_slice %7 {offsets = [0, 0, 64], sizes = [2, 8, 8], strides = [1, 1, 1]} : vector<2x8x72xf32> to vector<2x8x8xf32>
    %9 = tpu.iota {dimensions = array<i32: 0>} : vector<8x8xi32>
    %10 = tpu.iota {dimensions = array<i32: 1>} : vector<8x8xi32>
    %11 = arith.cmpi sle, %10, %9 : vector<8x8xi32>
    %cst_6 = arith.constant 0.000000e+00 : f32
    %cst_7 = arith.constant 0xFF800000 : f32
    %12 = vector.broadcast %cst_6 : f32 to vector<8x8xf32>
    %13 = vector.broadcast %cst_7 : f32 to vector<8x8xf32>
    %14 = arith.select %11, %12, %13 : vector<8x8xi1>, vector<8x8xf32>
    %cst_8 = arith.constant 0.000000e+00 : f32
    %15 = vector.broadcast %cst_8 : f32 to vector<2x8x8xf32>
    %16 = vector.extract_strided_slice %7 {offsets = [0, 0, 0], sizes = [2, 8, 8], strides = [1, 1, 1]} : vector<2x8x72xf32> to vector<2x8x8xf32>
    %17 = vector.extract_strided_slice %7 {offsets = [0, 0, 32], sizes = [2, 8, 8], strides = [1, 1, 1]} : vector<2x8x72xf32> to vector<2x8x8xf32>
    "tpu.trace_start"() <{level = 10 : i32, message = "bqd,bkd->bqk"}> : () -> ()
    %cst_9 = arith.constant dense<0.000000e+00> : vector<2x8x8xf32>
    %18 = tpu.matmul %16, %17, %cst_9 {dimension_numbers = #tpu.dot_dimension_numbers<[2], [2], [1], [1], [0, 0, 0, 1, 1, 1], [0], [0]>} : vector<2x8x8xf32>, vector<2x8x8xf32>, vector<2x8x8xf32> -> vector<2x8x8xf32>
    "tpu.trace_stop"() : () -> ()
    %19 = vector.shape_cast %14 : vector<8x8xf32> to vector<1x8x8xf32>
    %20 = vector.broadcast %19 : vector<1x8x8xf32> to vector<2x8x8xf32>
    %21 = arith.addf %18, %20 : vector<2x8x8xf32>
    %cst_10 = arith.constant dense<0xFF800000> : vector<2x8xf32>
    %22 = vector.multi_reduction <maximumf>, %21, %cst_10 [2] : vector<2x8x8xf32> to vector<2x8xf32>
    %23 = vector.shape_cast %22 : vector<2x8xf32> to vector<2x8x1xf32>
    %24 = vector.broadcast %23 : vector<2x8x1xf32> to vector<2x8x8xf32>
    %25 = arith.subf %21, %24 : vector<2x8x8xf32>
    %26 = math.exp %25 : vector<2x8x8xf32>
    %cst_11 = arith.constant dense<0.000000e+00> : vector<2x8xf32>
    %27 = vector.multi_reduction <add>, %26, %cst_11 [2] : vector<2x8x8xf32> to vector<2x8xf32>
    %28 = vector.shape_cast %27 : vector<2x8xf32> to vector<2x8x1xf32>
    %29 = tpu.reciprocal %28 {approx = true} : vector<2x8x1xf32> -> vector<2x8x1xf32>
    %30 = arith.mulf %28, %29 : vector<2x8x1xf32>
    %cst_12 = arith.constant 2.000000e+00 : f32
    %31 = vector.broadcast %cst_12 : f32 to vector<2x8x1xf32>
    %32 = arith.subf %31, %30 : vector<2x8x1xf32>
    %33 = arith.mulf %29, %32 : vector<2x8x1xf32>
    %34 = vector.broadcast %33 : vector<2x8x1xf32> to vector<2x8x8xf32>
    %35 = arith.mulf %26, %34 : vector<2x8x8xf32>
    "tpu.trace_start"() <{level = 10 : i32, message = "bqk,bkd->bqd"}> : () -> ()
    %cst_13 = arith.constant dense<0.000000e+00> : vector<2x8x8xf32>
    %36 = tpu.matmul %35, %8, %cst_13 {dimension_numbers = #tpu.dot_dimension_numbers<[2], [1], [1], [2], [0, 0, 0, 1, 1, 2], [0], [0]>} : vector<2x8x8xf32>, vector<2x8x8xf32>, vector<2x8x8xf32> -> vector<2x8x8xf32>
    "tpu.trace_stop"() : () -> ()
    %37 = arith.addf %15, %36 : vector<2x8x8xf32>
    %38 = vector.extract_strided_slice %7 {offsets = [0, 0, 8], sizes = [2, 8, 8], strides = [1, 1, 1]} : vector<2x8x72xf32> to vector<2x8x8xf32>
    %39 = vector.extract_strided_slice %7 {offsets = [0, 0, 40], sizes = [2, 8, 8], strides = [1, 1, 1]} : vector<2x8x72xf32> to vector<2x8x8xf32>
    "tpu.trace_start"() <{level = 10 : i32, message = "bqd,bkd->bqk"}> : () -> ()
    %cst_14 = arith.constant dense<0.000000e+00> : vector<2x8x8xf32>
    %40 = tpu.matmul %38, %39, %cst_14 {dimension_numbers = #tpu.dot_dimension_numbers<[2], [2], [1], [1], [0, 0, 0, 1, 1, 1], [0], [0]>} : vector<2x8x8xf32>, vector<2x8x8xf32>, vector<2x8x8xf32> -> vector<2x8x8xf32>
    "tpu.trace_stop"() : () -> ()
    %41 = vector.shape_cast %14 : vector<8x8xf32> to vector<1x8x8xf32>
    %42 = vector.broadcast %41 : vector<1x8x8xf32> to vector<2x8x8xf32>
    %43 = arith.addf %40, %42 : vector<2x8x8xf32>
    %cst_15 = arith.constant dense<0xFF800000> : vector<2x8xf32>
    %44 = vector.multi_reduction <maximumf>, %43, %cst_15 [2] : vector<2x8x8xf32> to vector<2x8xf32>
    %45 = vector.shape_cast %44 : vector<2x8xf32> to vector<2x8x1xf32>
    %46 = vector.broadcast %45 : vector<2x8x1xf32> to vector<2x8x8xf32>
    %47 = arith.subf %43, %46 : vector<2x8x8xf32>
    %48 = math.exp %47 : vector<2x8x8xf32>
    %cst_16 = arith.constant dense<0.000000e+00> : vector<2x8xf32>
    %49 = vector.multi_reduction <add>, %48, %cst_16 [2] : vector<2x8x8xf32> to vector<2x8xf32>
    %50 = vector.shape_cast %49 : vector<2x8xf32> to vector<2x8x1xf32>
    %51 = tpu.reciprocal %50 {approx = true} : vector<2x8x1xf32> -> vector<2x8x1xf32>
    %52 = arith.mulf %50, %51 : vector<2x8x1xf32>
    %cst_17 = arith.constant 2.000000e+00 : f32
    %53 = vector.broadcast %cst_17 : f32 to vector<2x8x1xf32>
    %54 = arith.subf %53, %52 : vector<2x8x1xf32>
    %55 = arith.mulf %51, %54 : vector<2x8x1xf32>
    %56 = vector.broadcast %55 : vector<2x8x1xf32> to vector<2x8x8xf32>
    %57 = arith.mulf %48, %56 : vector<2x8x8xf32>
    "tpu.trace_start"() <{level = 10 : i32, message = "bqk,bkd->bqd"}> : () -> ()
    %cst_18 = arith.constant dense<0.000000e+00> : vector<2x8x8xf32>
    %58 = tpu.matmul %57, %8, %cst_18 {dimension_numbers = #tpu.dot_dimension_numbers<[2], [1], [1], [2], [0, 0, 0, 1, 1, 2], [0], [0]>} : vector<2x8x8xf32>, vector<2x8x8xf32>, vector<2x8x8xf32> -> vector<2x8x8xf32>
    "tpu.trace_stop"() : () -> ()
    %59 = arith.addf %37, %58 : vector<2x8x8xf32>
    %60 = vector.extract_strided_slice %7 {offsets = [0, 0, 16], sizes = [2, 8, 8], strides = [1, 1, 1]} : vector<2x8x72xf32> to vector<2x8x8xf32>
    %61 = vector.extract_strided_slice %7 {offsets = [0, 0, 48], sizes = [2, 8, 8], strides = [1, 1, 1]} : vector<2x8x72xf32> to vector<2x8x8xf32>
    "tpu.trace_start"() <{level = 10 : i32, message = "bqd,bkd->bqk"}> : () -> ()
    %cst_19 = arith.constant dense<0.000000e+00> : vector<2x8x8xf32>
    %62 = tpu.matmul %60, %61, %cst_19 {dimension_numbers = #tpu.dot_dimension_numbers<[2], [2], [1], [1], [0, 0, 0, 1, 1, 1], [0], [0]>} : vector<2x8x8xf32>, vector<2x8x8xf32>, vector<2x8x8xf32> -> vector<2x8x8xf32>
    "tpu.trace_stop"() : () -> ()
    %63 = vector.shape_cast %14 : vector<8x8xf32> to vector<1x8x8xf32>
    %64 = vector.broadcast %63 : vector<1x8x8xf32> to vector<2x8x8xf32>
    %65 = arith.addf %62, %64 : vector<2x8x8xf32>
    %cst_20 = arith.constant dense<0xFF800000> : vector<2x8xf32>
    %66 = vector.multi_reduction <maximumf>, %65, %cst_20 [2] : vector<2x8x8xf32> to vector<2x8xf32>
    %67 = vector.shape_cast %66 : vector<2x8xf32> to vector<2x8x1xf32>
    %68 = vector.broadcast %67 : vector<2x8x1xf32> to vector<2x8x8xf32>
    %69 = arith.subf %65, %68 : vector<2x8x8xf32>
    %70 = math.exp %69 : vector<2x8x8xf32>
    %cst_21 = arith.constant dense<0.000000e+00> : vector<2x8xf32>
    %71 = vector.multi_reduction <add>, %70, %cst_21 [2] : vector<2x8x8xf32> to vector<2x8xf32>
    %72 = vector.shape_cast %71 : vector<2x8xf32> to vector<2x8x1xf32>
    %73 = tpu.reciprocal %72 {approx = true} : vector<2x8x1xf32> -> vector<2x8x1xf32>
    %74 = arith.mulf %72, %73 : vector<2x8x1xf32>
    %cst_22 = arith.constant 2.000000e+00 : f32
    %75 = vector.broadcast %cst_22 : f32 to vector<2x8x1xf32>
    %76 = arith.subf %75, %74 : vector<2x8x1xf32>
    %77 = arith.mulf %73, %76 : vector<2x8x1xf32>
    %78 = vector.broadcast %77 : vector<2x8x1xf32> to vector<2x8x8xf32>
    %79 = arith.mulf %70, %78 : vector<2x8x8xf32>
    "tpu.trace_start"() <{level = 10 : i32, message = "bqk,bkd->bqd"}> : () -> ()
    %cst_23 = arith.constant dense<0.000000e+00> : vector<2x8x8xf32>
    %80 = tpu.matmul %79, %8, %cst_23 {dimension_numbers = #tpu.dot_dimension_numbers<[2], [1], [1], [2], [0, 0, 0, 1, 1, 2], [0], [0]>} : vector<2x8x8xf32>, vector<2x8x8xf32>, vector<2x8x8xf32> -> vector<2x8x8xf32>
    "tpu.trace_stop"() : () -> ()
    %81 = arith.addf %59, %80 : vector<2x8x8xf32>
    %82 = vector.extract_strided_slice %7 {offsets = [0, 0, 24], sizes = [2, 8, 8], strides = [1, 1, 1]} : vector<2x8x72xf32> to vector<2x8x8xf32>
    %83 = vector.extract_strided_slice %7 {offsets = [0, 0, 56], sizes = [2, 8, 8], strides = [1, 1, 1]} : vector<2x8x72xf32> to vector<2x8x8xf32>
    "tpu.trace_start"() <{level = 10 : i32, message = "bqd,bkd->bqk"}> : () -> ()
    %cst_24 = arith.constant dense<0.000000e+00> : vector<2x8x8xf32>
    %84 = tpu.matmul %82, %83, %cst_24 {dimension_numbers = #tpu.dot_dimension_numbers<[2], [2], [1], [1], [0, 0, 0, 1, 1, 1], [0], [0]>} : vector<2x8x8xf32>, vector<2x8x8xf32>, vector<2x8x8xf32> -> vector<2x8x8xf32>
    "tpu.trace_stop"() : () -> ()
    %85 = vector.shape_cast %14 : vector<8x8xf32> to vector<1x8x8xf32>
    %86 = vector.broadcast %85 : vector<1x8x8xf32> to vector<2x8x8xf32>
    %87 = arith.addf %84, %86 : vector<2x8x8xf32>
    %cst_25 = arith.constant dense<0xFF800000> : vector<2x8xf32>
    %88 = vector.multi_reduction <maximumf>, %87, %cst_25 [2] : vector<2x8x8xf32> to vector<2x8xf32>
    %89 = vector.shape_cast %88 : vector<2x8xf32> to vector<2x8x1xf32>
    %90 = vector.broadcast %89 : vector<2x8x1xf32> to vector<2x8x8xf32>
    %91 = arith.subf %87, %90 : vector<2x8x8xf32>
    %92 = math.exp %91 : vector<2x8x8xf32>
    %cst_26 = arith.constant dense<0.000000e+00> : vector<2x8xf32>
    %93 = vector.multi_reduction <add>, %92, %cst_26 [2] : vector<2x8x8xf32> to vector<2x8xf32>
    %94 = vector.shape_cast %93 : vector<2x8xf32> to vector<2x8x1xf32>
    %95 = tpu.reciprocal %94 {approx = true} : vector<2x8x1xf32> -> vector<2x8x1xf32>
    %96 = arith.mulf %94, %95 : vector<2x8x1xf32>
    %cst_27 = arith.constant 2.000000e+00 : f32
    %97 = vector.broadcast %cst_27 : f32 to vector<2x8x1xf32>
    %98 = arith.subf %97, %96 : vector<2x8x1xf32>
    %99 = arith.mulf %95, %98 : vector<2x8x1xf32>
    %100 = vector.broadcast %99 : vector<2x8x1xf32> to vector<2x8x8xf32>
    %101 = arith.mulf %92, %100 : vector<2x8x8xf32>
    "tpu.trace_start"() <{level = 10 : i32, message = "bqk,bkd->bqd"}> : () -> ()
    %cst_28 = arith.constant dense<0.000000e+00> : vector<2x8x8xf32>
    %102 = tpu.matmul %101, %8, %cst_28 {dimension_numbers = #tpu.dot_dimension_numbers<[2], [1], [1], [2], [0, 0, 0, 1, 1, 2], [0], [0]>} : vector<2x8x8xf32>, vector<2x8x8xf32>, vector<2x8x8xf32> -> vector<2x8x8xf32>
    "tpu.trace_stop"() : () -> ()
    %103 = arith.addf %81, %102 : vector<2x8x8xf32>
    %104 = tpu.concatenate %36, %58, %80, %102 in 2 : vector<2x8x8xf32>, vector<2x8x8xf32>, vector<2x8x8xf32>, vector<2x8x8xf32> -> vector<2x8x32xf32>
    %c0_29 = arith.constant 0 : index
    %c0_30 = arith.constant 0 : index
    %c0_31 = arith.constant 0 : index
    %105 = vector.load %arg7[%c0_29, %c0_30, %c0_31] : memref<2x8x32xf32, #tpu.memory_space<vmem>>, vector<2x8x32xf32>
    tpu.vector_store %arg7[%c0_29, %c0_30, %c0_31], %104 {strides = array<i32>} : memref<2x8x32xf32, #tpu.memory_space<vmem>>, vector<2x8x32xf32>,
    %106 = vector.shape_cast %103 : vector<2x8x8xf32> to vector<16x8xf32>
    %c0_32 = arith.constant 0 : index
    %c0_33 = arith.constant 0 : index
    %107 = vector.load %arg4[%c0_32, %c0_33] : memref<8x32xf32, #tpu.memory_space<vmem>>, vector<8x32xf32>
    %cst_34 = arith.constant dense<0.000000e+00> : vector<16x32xf32>
    %108 = tpu.matmul %106, %107, %cst_34 {dimension_numbers = #tpu.dot_dimension_numbers<[1], [0], [0], [1], [0, 0, 1, 1], [], []>} : vector<16x8xf32>, vector<8x32xf32>, vector<16x32xf32> -> vector<16x32xf32>
    %c0_35 = arith.constant 0 : index
    %c0_36 = arith.constant 0 : index
    %109 = vector.load %arg5[%c0_35, %c0_36] : memref<1x32xf32, #tpu.memory_space<vmem>>, vector<1x32xf32>
    %110 = vector.broadcast %109 : vector<1x32xf32> to vector<16x32xf32>
    %111 = arith.addf %108, %110 : vector<16x32xf32>
    %112 = vector.shape_cast %111 : vector<16x32xf32> to vector<2x8x32xf32>
    %c0_37 = arith.constant 0 : index
    %c0_38 = arith.constant 0 : index
    %c0_39 = arith.constant 0 : index
    %113 = vector.load %arg6[%c0_37, %c0_38, %c0_39] : memref<2x8x32xf32, #tpu.memory_space<vmem>>, vector<2x8x32xf32>
    tpu.vector_store %arg6[%c0_37, %c0_38, %c0_39], %112 {strides = array<i32>} : memref<2x8x32xf32, #tpu.memory_space<vmem>>, vector<2x8x32xf32>,
    return
  }
  func.func @transform_0(%arg0: i32) -> (i32, i32, i32) {
    %c0_i32 = arith.constant 0 : i32
    %c0_i32_0 = arith.constant 0 : i32
    %c0_i32_1 = arith.constant 0 : i32
    return %arg0, %c0_i32, %c0_i32_0 : i32, i32, i32
  }
  func.func @transform_1(%arg0: i32) -> (i32, i32) {
    %c0_i32 = arith.constant 0 : i32
    %c0_i32_0 = arith.constant 0 : i32
    %c0_i32_1 = arith.constant 0 : i32
    return %c0_i32, %c0_i32_0 : i32, i32
  }
  func.func @transform_2(%arg0: i32) -> (i32, i32) {
    %c0_i32 = arith.constant 0 : i32
    %c0_i32_0 = arith.constant 0 : i32
    %c0_i32_1 = arith.constant 0 : i32
    return %c0_i32, %c0_i32_0 : i32, i32
  }
  func.func @transform_3(%arg0: i32) -> (i32, i32) {
    %c0_i32 = arith.constant 0 : i32
    %c0_i32_0 = arith.constant 0 : i32
    %c0_i32_1 = arith.constant 0 : i32
    return %c0_i32, %c0_i32_0 : i32, i32
  }
  func.func @transform_4(%arg0: i32) -> (i32, i32) {
    %c0_i32 = arith.constant 0 : i32
    %c0_i32_0 = arith.constant 0 : i32
    %c0_i32_1 = arith.constant 0 : i32
    return %c0_i32, %c0_i32_0 : i32, i32
  }
  func.func @transform_5(%arg0: i32) -> (i32, i32, i32) {
    %c0_i32 = arith.constant 0 : i32
    %c0_i32_0 = arith.constant 0 : i32
    %c0_i32_1 = arith.constant 0 : i32
    return %arg0, %c0_i32, %c0_i32_0 : i32, i32, i32
  }
  func.func @transform_6(%arg0: i32) -> (i32, i32, i32) {
    %c0_i32 = arith.constant 0 : i32
    %c0_i32_0 = arith.constant 0 : i32
    %c0_i32_1 = arith.constant 0 : i32
    return %arg0, %c0_i32, %c0_i32_0 : i32, i32, i32
  }
}

</mosaic_0001>

<llo_original>
// kernel: tpu_custom_call.1
$region0: #{tpu_custom_call.1}
  #allocation0 [shape = 'u32[]', space=smem, size = 0x4, offset = 0x4, fixed_abs, tag = 'smem constant byte address 0x4 - core index']
  #allocation1 [shape = 'u32[144,128]{1,0:T(1,128)}', space=vmem, size = 0x12000, scoped, tag = 'internal scratch']
  %s0 = inlined_call_operand.hbm [shape: f32[2,8,32], index: 0, kind: input, shape index: {}]
  %s1 = inlined_call_operand.hbm [shape: f32[32,72], index: 1, kind: input, shape index: {}]
  %s2 = inlined_call_operand.vmem [shape: f32[1,72], index: 2, kind: input, shape index: {}]
  %s3 = inlined_call_operand.vmem [shape: f32[8,32], index: 3, kind: input, shape index: {}]
  %s4 = inlined_call_operand.vmem [shape: f32[1,32], index: 4, kind: input, shape index: {}]
  %s5 = inlined_call_operand.hbm [shape: f32[2,8,32], index: 5, kind: output, shape index: {0}]
  %s6 = inlined_call_operand.hbm [shape: f32[2,8,32], index: 6, kind: output, shape index: {1}]
  %7 = xla_tuple %s5, %s6
  %s8 = sld [smem:[#allocation0]]
  $region46: #{tpu_custom_call.1} parent=0
    _
  %s10 = ssub.s32 1, %s8
  %s11 = scalar_select 0, %s10, %s8
  $region1: #{tpu_custom_call.1} parent=0
    #allocation2 [shape = 'u8[8192]{0}', space=vmem, size = 0x2000, scoped, tag = 'input window, operand 0, single buffered']
    #allocation3 [shape = 's32[1]{0}', space=sflag, size = 0x4, scoped, tag = 'scoped memory for tpu_custom_call.1']
    #allocation4 [shape = 's32[1]{0}', space=sflag, size = 0x4, scoped, tag = 'scoped memory for tpu_custom_call.1']
    #allocation5 [shape = 'u8[16384]{0}', space=vmem, size = 0x4000, scoped, tag = 'input window, operand 1, single buffered']
    #allocation6 [shape = 's32[1]{0}', space=sflag, size = 0x4, scoped, tag = 'scoped memory for tpu_custom_call.1']
    #allocation7 [shape = 'u8[8192]{0}', space=vmem, size = 0x2000, scoped, tag = 'output window, operand 0, single buffered']
    #allocation8 [shape = 'u8[8192]{0}', space=vmem, size = 0x2000, scoped, tag = 'output window, operand 1, single buffered']
    #allocation9 [shape = 's32[1]{0}', space=sflag, size = 0x4, scoped, tag = 'scoped memory for tpu_custom_call.1']
    %12 = vsyncpa [#allocation3], 0
    %13 = vsyncpa [#allocation6], 0
    %14 = vsyncpa [#allocation4], 0
    %15 = vsyncpa [#allocation9], 0
    // Predicated region
    $region2: #{tpu_custom_call.1} parent=1 // pred_check
      _
    $region3: #{tpu_custom_call.1} parent=1 // pred_check_branch
      %17 = sbr.rel (0) target = $region5
    $region4: #{tpu_custom_call.1} parent=1 // pred_region
      %s19 = ssub.s32 256, 256
      %20 = vsyncadd [#allocation3], %s19
      %s21 = sshll.u32 [#allocation2], 4
      %s22 = int_to_ptr.vmem [resolvable:$true] %s21
      %27 = dma.hbm_to_vmem [thread:$0]  %s0, 256, %s22, [#allocation3], 128, 128, 8
    $region5: #{tpu_custom_call.1} parent=1 // pred_fallthru
      _
    // Predicated region
    $region6: #{tpu_custom_call.1} parent=1 // pred_check
      _
    $region7: #{tpu_custom_call.1} parent=1 // pred_check_branch
      %29 = sbr.rel (0) target = $region9
    $region8: #{tpu_custom_call.1} parent=1 // pred_region
      %s31 = ssub.s32 512, 512
      %32 = vsyncadd [#allocation6], %s31
      %s33 = sshll.u32 [#allocation5], 4
      %s34 = int_to_ptr.vmem [resolvable:$true] %s33
      %39 = dma.hbm_to_vmem [thread:$0]  %s1, 512, %s34, [#allocation6], 128, 128, 8
    $region9: #{tpu_custom_call.1} parent=1 // pred_fallthru
      _
    // Predicated region
    $region10: #{tpu_custom_call.1} parent=1 // pred_check
      _
    $region11: #{tpu_custom_call.1} parent=1 // pred_check_branch
      %41 = sbr.rel (0) target = $region13
    $region12: #{tpu_custom_call.1} parent=1 // pred_region
      _
    $region13: #{tpu_custom_call.1} parent=1 // pred_fallthru
      _
    // Predicated region
    $region14: #{tpu_custom_call.1} parent=1 // pred_check
      _
    $region15: #{tpu_custom_call.1} parent=1 // pred_check_branch
      %43 = sbr.rel (0) target = $region17
    $region16: #{tpu_custom_call.1} parent=1 // pred_region
      _
    $region17: #{tpu_custom_call.1} parent=1 // pred_fallthru
      _
    // Predicated region
    $region18: #{tpu_custom_call.1} parent=1 // pred_check
      _
    $region19: #{tpu_custom_call.1} parent=1 // pred_check_branch
      %45 = sbr.rel (0) target = $region21
    $region20: #{tpu_custom_call.1} parent=1 // pred_region
      _
    $region21: #{tpu_custom_call.1} parent=1 // pred_fallthru
      _
    // Predicated region
    $region22: #{tpu_custom_call.1} parent=1 // pred_check
      _
    $region23: #{tpu_custom_call.1} parent=1 // pred_check_branch
      %47 = sbr.rel (0) target = $region25
    $region24: #{tpu_custom_call.1} parent=1 // pred_region
      %48 = dma.done [#allocation3], 256
    $region25: #{tpu_custom_call.1} parent=1 // pred_fallthru
      _
    // Predicated region
    $region26: #{tpu_custom_call.1} parent=1 // pred_check
      _
    $region27: #{tpu_custom_call.1} parent=1 // pred_check_branch
      %50 = sbr.rel (0) target = $region29
    $region28: #{tpu_custom_call.1} parent=1 // pred_region
      %51 = dma.done [#allocation6], 512
    $region29: #{tpu_custom_call.1} parent=1 // pred_fallthru
      _
    %v52 = vld [vmem:[#allocation2] sm:$0xff]
    %v53 = vld [vmem:[#allocation2 + $0x8] sm:$0xff]
    %v54 = vld [vmem:[#allocation5] sm:$0xff]
    %v55 = vld [vmem:[#allocation5 + $0x8] sm:$0xff]
    %v56 = vld [vmem:[#allocation5 + $0x10] sm:$0xff]
    %v57 = vld [vmem:[#allocation5 + $0x18] sm:$0xff]
    %v58 = vld [vmem:[%s2] sm:$0x1]
    %v60 = vlaneseq
    %v61 = vshrl.u32 %v60, 7
    %v62 = vsub.s32 0, %v61
    %v63 = vrot.slane %v58, %v62
    %vm65 = vcmask 261120
    %v67 = vsel %vm65, %v52, 0
    %v70 = vsel %vm65, %v53, 0
    %72 = vmatprep.subr.mxu0 0.0
    %73 = vmatpush1.msra.mxu0 %v54
    %74 = vmatprep.subr.mxu0 0.0
    %75 = vmatpush1.msra.mxu0 %v55
    %76 = vmatprep.subr.mxu0 0.0
    %77 = vmatpush1.msra.mxu0 %v56
    %78 = vmatprep.subr.mxu0 0.0
    %79 = vmatpush1.msra.mxu0 %v57
    %80 = vmatprep.subr.mxu0 0.0
    %81 = vmatpush1.msra.mxu0 0.0
    %82 = vmatprep.subr.mxu0 0.0
    %83 = vmatpush1.msra.mxu0 0.0
    %84 = vmatprep.subr.mxu0 0.0
    %85 = vmatpush1.msra.mxu0 0.0
    %86 = vmatprep.subr.mxu0 0.0
    %87 = vmatpush1.msra.mxu0 0.0
    %88 = vmatprep.subr.mxu0 0.0
    %89 = vmatpush1.msra.mxu0 0.0
    %90 = vmatprep.subr.mxu0 0.0
    %91 = vmatpush1.msra.mxu0 0.0
    %92 = vmatprep.subr.mxu0 0.0
    %93 = vmatpush1.msra.mxu0 0.0
    %94 = vmatprep.subr.mxu0 0.0
    %95 = vmatpush1.msra.mxu0 0.0
    %96 = vmatprep.subr.mxu0 0.0
    %97 = vmatpush1.msra.mxu0 0.0
    %98 = vmatprep.subr.mxu0 0.0
    %99 = vmatpush1.msra.mxu0 0.0
    %100 = vmatprep.subr.mxu0 0.0
    %101 = vmatpush1.msra.mxu0 0.0
    %102 = vmatprep.subr.mxu0 0.0
    %103 = vmatpush1.msra.mxu0 0.0
    %104 = vmatprep.subr.mxu0 0.0
    %105 = vmatpush1.msra.mxu0 0.0
    %106 = vmatprep.subr.mxu0 0.0
    %107 = vmatpush1.msra.mxu0 0.0
    %108 = vmatprep.subr.mxu0 0.0
    %109 = vmatpush1.msra.mxu0 0.0
    %110 = vmatprep.subr.mxu0 0.0
    %111 = vmatpush1.msra.mxu0 0.0
    %112 = vmatprep.subr.mxu0 0.0
    %113 = vmatpush1.msra.mxu0 0.0
    %114 = vmatprep.subr.mxu0 0.0
    %115 = vmatpush1.msra.mxu0 0.0
    %116 = vmatprep.subr.mxu0 0.0
    %117 = vmatpush1.msra.mxu0 0.0
    %118 = vmatprep.subr.mxu0 0.0
    %119 = vmatpush1.msra.mxu0 0.0
    %120 = vmatprep.subr.mxu0 0.0
    %121 = vmatpush1.msra.mxu0 0.0
    %122 = vmatprep.subr.mxu0 0.0
    %123 = vmatpush1.msra.mxu0 0.0
    %124 = vmatprep.subr.mxu0 0.0
    %125 = vmatpush1.msra.mxu0 0.0
    %126 = vmatprep.subr.mxu0 0.0
    %127 = vmatpush1.msra.mxu0 0.0
    %128 = vmatprep.subr.mxu0 0.0
    %129 = vmatpush1.msra.mxu0 0.0
    %130 = vmatprep.subr.mxu0 0.0
    %131 = vmatpush1.msra.mxu0 0.0
    %132 = vmatprep.subr.mxu0 0.0
    %133 = vmatpush1.msra.mxu0 0.0
    %134 = vmatprep.subr.mxu0 0.0
    %135 = vmatpush1.msra.mxu0 0.0
    %136 = vmatprep.mubr.f32.mxu0 0.0
    %137 = vmatmul.mubr.f32.gmra.mrb[0].mxu0 %v67
    %v138 = vpop.f32.mrb[0].mxu0
    %v139 = vadd.f32 %v63, %v138
    %v140 = vpop.f32.mrb[0].mxu0
    %141 = vmatprep.mubr.f32.mxu0 0.0
    %142 = vmatmul.mubr.f32.gmra.mrb[0].mxu0 %v70
    %v143 = vpop.f32.mrb[0].mxu0
    %v144 = vadd.f32 %v63, %v143
    %v145 = vpop.f32.mrb[0].mxu0
    %146 = vdwg.mxu0
    %v147 = vlaneseq
    %v148 = vshrl.u32 %v147, 7
    %v149 = vlaneseq
    %v150 = vand.u32 %v149, 127
    %vm151 = vcmp.le.s32.totalorder %v150, %v148
    %v152 = vsel %vm151, 0.0, -inf
    %154 = vrot.lane.b32.xlu0 %v139, 96
    %v155 = vpop.permute.xlu0 %154
    %vm156 = vcmask 64512
    %v157 = vsel %vm156, %v139, 0
    %v159 = vsel %vm156, %v155, 0
    %161 = vmatprep.subr.mxu0 0.0
    %162 = vmatpush1.xpose.msra.mxu0 %v159
    %163 = vmatprep.subr.mxu0 0.0
    %164 = vmatpush1.xpose.msra.mxu0 0.0
    %165 = vmatprep.subr.mxu0 0.0
    %166 = vmatpush1.xpose.msra.mxu0 0.0
    %167 = vmatprep.subr.mxu0 0.0
    %168 = vmatpush1.xpose.msra.mxu0 0.0
    %169 = vmatprep.subr.mxu0 0.0
    %170 = vmatpush1.xpose.msra.mxu0 0.0
    %171 = vmatprep.subr.mxu0 0.0
    %172 = vmatpush1.xpose.msra.mxu0 0.0
    %173 = vmatprep.subr.mxu0 0.0
    %174 = vmatpush1.xpose.msra.mxu0 0.0
    %175 = vmatprep.subr.mxu0 0.0
    %176 = vmatpush1.xpose.msra.mxu0 0.0
    %177 = vmatprep.subr.mxu0 0.0
    %178 = vmatpush1.xpose.msra.mxu0 0.0
    %179 = vmatprep.subr.mxu0 0.0
    %180 = vmatpush1.xpose.msra.mxu0 0.0
    %181 = vmatprep.subr.mxu0 0.0
    %182 = vmatpush1.xpose.msra.mxu0 0.0
    %183 = vmatprep.subr.mxu0 0.0
    %184 = vmatpush1.xpose.msra.mxu0 0.0
    %185 = vmatprep.subr.mxu0 0.0
    %186 = vmatpush1.xpose.msra.mxu0 0.0
    %187 = vmatprep.subr.mxu0 0.0
    %188 = vmatpush1.xpose.msra.mxu0 0.0
    %189 = vmatprep.subr.mxu0 0.0
    %190 = vmatpush1.xpose.msra.mxu0 0.0
    %191 = vmatprep.subr.mxu0 0.0
    %192 = vmatpush1.xpose.msra.mxu0 0.0
    %193 = vmatprep.subr.mxu0 0.0
    %194 = vmatpush1.xpose.msra.mxu0 0.0
    %195 = vmatprep.subr.mxu0 0.0
    %196 = vmatpush1.xpose.msra.mxu0 0.0
    %197 = vmatprep.subr.mxu0 0.0
    %198 = vmatpush1.xpose.msra.mxu0 0.0
    %199 = vmatprep.subr.mxu0 0.0
    %200 = vmatpush1.xpose.msra.mxu0 0.0
    %201 = vmatprep.subr.mxu0 0.0
    %202 = vmatpush1.xpose.msra.mxu0 0.0
    %203 = vmatprep.subr.mxu0 0.0
    %204 = vmatpush1.xpose.msra.mxu0 0.0
    %205 = vmatprep.subr.mxu0 0.0
    %206 = vmatpush1.xpose.msra.mxu0 0.0
    %207 = vmatprep.subr.mxu0 0.0
    %208 = vmatpush1.xpose.msra.mxu0 0.0
    %209 = vmatprep.subr.mxu0 0.0
    %210 = vmatpush1.xpose.msra.mxu0 0.0
    %211 = vmatprep.subr.mxu0 0.0
    %212 = vmatpush1.xpose.msra.mxu0 0.0
    %213 = vmatprep.subr.mxu0 0.0
    %214 = vmatpush1.xpose.msra.mxu0 0.0
    %215 = vmatprep.subr.mxu0 0.0
    %216 = vmatpush1.xpose.msra.mxu0 0.0
    %217 = vmatprep.subr.mxu0 0.0
    %218 = vmatpush1.xpose.msra.mxu0 0.0
    %219 = vmatprep.subr.mxu0 0.0
    %220 = vmatpush1.xpose.msra.mxu0 0.0
    %221 = vmatprep.subr.mxu0 0.0
    %222 = vmatpush1.xpose.msra.mxu0 0.0
    %223 = vmatprep.subr.mxu0 0.0
    %224 = vmatpush1.xpose.msra.mxu0 0.0
    %225 = vmatprep.mubr.f32.mxu0 0.0
    %226 = vmatmul.mubr.f32.gmra.mrb[0].mxu0 %v157
    %v227 = vpop.f32.mrb[0].mxu0
    %v228 = vadd.f32 %v152, %v227
    %v229 = vpop.f32.mrb[0].mxu0
    %230 = vdwg.mxu0
    %232 = vrot.lane.b32.xlu0 %v144, 96
    %v233 = vpop.permute.xlu0 %232
    %v234 = vsel %vm156, %v144, 0
    %v236 = vsel %vm156, %v233, 0
    %238 = vmatprep.subr.mxu0 0.0
    %239 = vmatpush1.xpose.msra.mxu0 %v236
    %240 = vmatprep.subr.mxu0 0.0
    %241 = vmatpush1.xpose.msra.mxu0 0.0
    %242 = vmatprep.subr.mxu0 0.0
    %243 = vmatpush1.xpose.msra.mxu0 0.0
    %244 = vmatprep.subr.mxu0 0.0
    %245 = vmatpush1.xpose.msra.mxu0 0.0
    %246 = vmatprep.subr.mxu0 0.0
    %247 = vmatpush1.xpose.msra.mxu0 0.0
    %248 = vmatprep.subr.mxu0 0.0
    %249 = vmatpush1.xpose.msra.mxu0 0.0
    %250 = vmatprep.subr.mxu0 0.0
    %251 = vmatpush1.xpose.msra.mxu0 0.0
    %252 = vmatprep.subr.mxu0 0.0
    %253 = vmatpush1.xpose.msra.mxu0 0.0
    %254 = vmatprep.subr.mxu0 0.0
    %255 = vmatpush1.xpose.msra.mxu0 0.0
    %256 = vmatprep.subr.mxu0 0.0
    %257 = vmatpush1.xpose.msra.mxu0 0.0
    %258 = vmatprep.subr.mxu0 0.0
    %259 = vmatpush1.xpose.msra.mxu0 0.0
    %260 = vmatprep.subr.mxu0 0.0
    %261 = vmatpush1.xpose.msra.mxu0 0.0
    %262 = vmatprep.subr.mxu0 0.0
    %263 = vmatpush1.xpose.msra.mxu0 0.0
    %264 = vmatprep.subr.mxu0 0.0
    %265 = vmatpush1.xpose.msra.mxu0 0.0
    %266 = vmatprep.subr.mxu0 0.0
    %267 = vmatpush1.xpose.msra.mxu0 0.0
    %268 = vmatprep.subr.mxu0 0.0
    %269 = vmatpush1.xpose.msra.mxu0 0.0
    %270 = vmatprep.subr.mxu0 0.0
    %271 = vmatpush1.xpose.msra.mxu0 0.0
    %272 = vmatprep.subr.mxu0 0.0
    %273 = vmatpush1.xpose.msra.mxu0 0.0
    %274 = vmatprep.subr.mxu0 0.0
    %275 = vmatpush1.xpose.msra.mxu0 0.0
    %276 = vmatprep.subr.mxu0 0.0
    %277 = vmatpush1.xpose.msra.mxu0 0.0
    %278 = vmatprep.subr.mxu0 0.0
    %279 = vmatpush1.xpose.msra.mxu0 0.0
    %280 = vmatprep.subr.mxu0 0.0
    %281 = vmatpush1.xpose.msra.mxu0 0.0
    %282 = vmatprep.subr.mxu0 0.0
    %283 = vmatpush1.xpose.msra.mxu0 0.0
    %284 = vmatprep.subr.mxu0 0.0
    %285 = vmatpush1.xpose.msra.mxu0 0.0
    %286 = vmatprep.subr.mxu0 0.0
    %287 = vmatpush1.xpose.msra.mxu0 0.0
    %288 = vmatprep.subr.mxu0 0.0
    %289 = vmatpush1.xpose.msra.mxu0 0.0
    %290 = vmatprep.subr.mxu0 0.0
    %291 = vmatpush1.xpose.msra.mxu0 0.0
    %292 = vmatprep.subr.mxu0 0.0
    %293 = vmatpush1.xpose.msra.mxu0 0.0
    %294 = vmatprep.subr.mxu0 0.0
    %295 = vmatpush1.xpose.msra.mxu0 0.0
    %296 = vmatprep.subr.mxu0 0.0
    %297 = vmatpush1.xpose.msra.mxu0 0.0
    %298 = vmatprep.subr.mxu0 0.0
    %299 = vmatpush1.xpose.msra.mxu0 0.0
    %300 = vmatprep.subr.mxu0 0.0
    %301 = vmatpush1.xpose.msra.mxu0 0.0
    %302 = vmatprep.mubr.f32.mxu0 0.0
    %303 = vmatmul.mubr.f32.gmra.mrb[0].mxu0 %v234
    %v304 = vpop.f32.mrb[0].mxu0
    %v305 = vadd.f32 %v152, %v304
    %v306 = vpop.f32.mrb[0].mxu0
    %307 = vdwg.mxu0
    %v308 = vsel %vm156, %v228, -inf
    %309 = vmax.xlane.f32.xlu0 %v308
    %v310 = vpop.xlane.xlu0 %309
    %v311 = vsel %vm156, %v305, -inf
    %312 = vmax.xlane.f32.xlu0 %v311
    %v313 = vpop.xlane.xlu0 %312
    %v314 = vsub.f32 %v228, %v310
    %v315 = vsub.f32 %v305, %v313
    %v316 = vmul.f32 %v314, 1.442695
    %v317 = vpow.pop %v316
    %v318 = vmul.f32 %v315, 1.442695
    %v319 = vpow.pop %v318
    %v320 = vsel %vm156, %v317, 0.0
    %321 = vadd.xlane.f32.xlu0 %v320
    %v322 = vpop.xlane.xlu0 %321
    %v323 = vsel %vm156, %v319, 0.0
    %324 = vadd.xlane.f32.xlu0 %v323
    %v325 = vpop.xlane.xlu0 %324
    %v326 = vrcp.pop %v322
    %v327 = vrcp.pop %v325
    %v328 = vmul.f32 %v322, %v326
    %v329 = vmul.f32 %v325, %v327
    %v330 = vsub.f32 2.0, %v328
    %v331 = vsub.f32 2.0, %v329
    %v332 = vmul.f32 %v326, %v330
    %v333 = vmul.f32 %v327, %v331
    %v334 = vmul.f32 %v317, %v332
    %v335 = vmul.f32 %v319, %v333
    %336 = vrot.lane.b32.xlu0 %v139, 64
    %v337 = vpop.permute.xlu0 %336
    %v340 = vsel %vm156, %v334, 0
    %342 = vmatprep.subr.mxu0 0.0
    %343 = vmatpush1.msra.mxu0 %v337
    %344 = vmatprep.subr.mxu0 0.0
    %345 = vmatpush1.msra.mxu0 0.0
    %346 = vmatprep.subr.mxu0 0.0
    %347 = vmatpush1.msra.mxu0 0.0
    %348 = vmatprep.subr.mxu0 0.0
    %349 = vmatpush1.msra.mxu0 0.0
    %350 = vmatprep.subr.mxu0 0.0
    %351 = vmatpush1.msra.mxu0 0.0
    %352 = vmatprep.subr.mxu0 0.0
    %353 = vmatpush1.msra.mxu0 0.0
    %354 = vmatprep.subr.mxu0 0.0
    %355 = vmatpush1.msra.mxu0 0.0
    %356 = vmatprep.subr.mxu0 0.0
    %357 = vmatpush1.msra.mxu0 0.0
    %358 = vmatprep.subr.mxu0 0.0
    %359 = vmatpush1.msra.mxu0 0.0
    %360 = vmatprep.subr.mxu0 0.0
    %361 = vmatpush1.msra.mxu0 0.0
    %362 = vmatprep.subr.mxu0 0.0
    %363 = vmatpush1.msra.mxu0 0.0
    %364 = vmatprep.subr.mxu0 0.0
    %365 = vmatpush1.msra.mxu0 0.0
    %366 = vmatprep.subr.mxu0 0.0
    %367 = vmatpush1.msra.mxu0 0.0
    %368 = vmatprep.subr.mxu0 0.0
    %369 = vmatpush1.msra.mxu0 0.0
    %370 = vmatprep.subr.mxu0 0.0
    %371 = vmatpush1.msra.mxu0 0.0
    %372 = vmatprep.subr.mxu0 0.0
    %373 = vmatpush1.msra.mxu0 0.0
    %374 = vmatprep.subr.mxu0 0.0
    %375 = vmatpush1.msra.mxu0 0.0
    %376 = vmatprep.subr.mxu0 0.0
    %377 = vmatpush1.msra.mxu0 0.0
    %378 = vmatprep.subr.mxu0 0.0
    %379 = vmatpush1.msra.mxu0 0.0
    %380 = vmatprep.subr.mxu0 0.0
    %381 = vmatpush1.msra.mxu0 0.0
    %382 = vmatprep.subr.mxu0 0.0
    %383 = vmatpush1.msra.mxu0 0.0
    %384 = vmatprep.subr.mxu0 0.0
    %385 = vmatpush1.msra.mxu0 0.0
    %386 = vmatprep.subr.mxu0 0.0
    %387 = vmatpush1.msra.mxu0 0.0
    %388 = vmatprep.subr.mxu0 0.0
    %389 = vmatpush1.msra.mxu0 0.0
    %390 = vmatprep.subr.mxu0 0.0
    %391 = vmatpush1.msra.mxu0 0.0
    %392 = vmatprep.subr.mxu0 0.0
    %393 = vmatpush1.msra.mxu0 0.0
    %394 = vmatprep.subr.mxu0 0.0
    %395 = vmatpush1.msra.mxu0 0.0
    %396 = vmatprep.subr.mxu0 0.0
    %397 = vmatpush1.msra.mxu0 0.0
    %398 = vmatprep.subr.mxu0 0.0
    %399 = vmatpush1.msra.mxu0 0.0
    %400 = vmatprep.subr.mxu0 0.0
    %401 = vmatpush1.msra.mxu0 0.0
    %402 = vmatprep.subr.mxu0 0.0
    %403 = vmatpush1.msra.mxu0 0.0
    %404 = vmatprep.subr.mxu0 0.0
    %405 = vmatpush1.msra.mxu0 0.0
    %406 = vmatprep.mubr.f32.mxu0 0.0
    %407 = vmatmul.mubr.f32.gmra.mrb[0].mxu0 %v340
    %v408 = vpop.f32.mrb[0].mxu0
    %v409 = vadd.f32 0.0, %v408
    %v410 = vpop.f32.mrb[0].mxu0
    %411 = vdwg.mxu0
    %412 = vrot.lane.b32.xlu0 %v144, 64
    %v413 = vpop.permute.xlu0 %412
    %v416 = vsel %vm156, %v335, 0
    %418 = vmatprep.subr.mxu0 0.0
    %419 = vmatpush1.msra.mxu0 %v413
    %420 = vmatprep.subr.mxu0 0.0
    %421 = vmatpush1.msra.mxu0 0.0
    %422 = vmatprep.subr.mxu0 0.0
    %423 = vmatpush1.msra.mxu0 0.0
    %424 = vmatprep.subr.mxu0 0.0
    %425 = vmatpush1.msra.mxu0 0.0
    %426 = vmatprep.subr.mxu0 0.0
    %427 = vmatpush1.msra.mxu0 0.0
    %428 = vmatprep.subr.mxu0 0.0
    %429 = vmatpush1.msra.mxu0 0.0
    %430 = vmatprep.subr.mxu0 0.0
    %431 = vmatpush1.msra.mxu0 0.0
    %432 = vmatprep.subr.mxu0 0.0
    %433 = vmatpush1.msra.mxu0 0.0
    %434 = vmatprep.subr.mxu0 0.0
    %435 = vmatpush1.msra.mxu0 0.0
    %436 = vmatprep.subr.mxu0 0.0
    %437 = vmatpush1.msra.mxu0 0.0
    %438 = vmatprep.subr.mxu0 0.0
    %439 = vmatpush1.msra.mxu0 0.0
    %440 = vmatprep.subr.mxu0 0.0
    %441 = vmatpush1.msra.mxu0 0.0
    %442 = vmatprep.subr.mxu0 0.0
    %443 = vmatpush1.msra.mxu0 0.0
    %444 = vmatprep.subr.mxu0 0.0
    %445 = vmatpush1.msra.mxu0 0.0
    %446 = vmatprep.subr.mxu0 0.0
    %447 = vmatpush1.msra.mxu0 0.0
    %448 = vmatprep.subr.mxu0 0.0
    %449 = vmatpush1.msra.mxu0 0.0
    %450 = vmatprep.subr.mxu0 0.0
    %451 = vmatpush1.msra.mxu0 0.0
    %452 = vmatprep.subr.mxu0 0.0
    %453 = vmatpush1.msra.mxu0 0.0
    %454 = vmatprep.subr.mxu0 0.0
    %455 = vmatpush1.msra.mxu0 0.0
    %456 = vmatprep.subr.mxu0 0.0
    %457 = vmatpush1.msra.mxu0 0.0
    %458 = vmatprep.subr.mxu0 0.0
    %459 = vmatpush1.msra.mxu0 0.0
    %460 = vmatprep.subr.mxu0 0.0
    %461 = vmatpush1.msra.mxu0 0.0
    %462 = vmatprep.subr.mxu0 0.0
    %463 = vmatpush1.msra.mxu0 0.0
    %464 = vmatprep.subr.mxu0 0.0
    %465 = vmatpush1.msra.mxu0 0.0
    %466 = vmatprep.subr.mxu0 0.0
    %467 = vmatpush1.msra.mxu0 0.0
    %468 = vmatprep.subr.mxu0 0.0
    %469 = vmatpush1.msra.mxu0 0.0
    %470 = vmatprep.subr.mxu0 0.0
    %471 = vmatpush1.msra.mxu0 0.0
    %472 = vmatprep.subr.mxu0 0.0
    %473 = vmatpush1.msra.mxu0 0.0
    %474 = vmatprep.subr.mxu0 0.0
    %475 = vmatpush1.msra.mxu0 0.0
    %476 = vmatprep.subr.mxu0 0.0
    %477 = vmatpush1.msra.mxu0 0.0
    %478 = vmatprep.subr.mxu0 0.0
    %479 = vmatpush1.msra.mxu0 0.0
    %480 = vmatprep.subr.mxu0 0.0
    %481 = vmatpush1.msra.mxu0 0.0
    %482 = vmatprep.mubr.f32.mxu0 0.0
    %483 = vmatmul.mubr.f32.gmra.mrb[0].mxu0 %v416
    %v484 = vpop.f32.mrb[0].mxu0
    %v485 = vadd.f32 0.0, %v484
    %v486 = vpop.f32.mrb[0].mxu0
    %487 = vdwg.mxu0
    %v488 = vadd.f32 %v409, 0.0
    %v489 = vadd.f32 %v485, 0.0
    %490 = vrot.lane.b32.xlu0 %v139, 120
    %v491 = vpop.permute.xlu0 %490
    %492 = vrot.lane.b32.xlu0 %v139, 88
    %v493 = vpop.permute.xlu0 %492
    %v494 = vsel %vm156, %v491, 0
    %v496 = vsel %vm156, %v493, 0
    %498 = vmatprep.subr.mxu0 0.0
    %499 = vmatpush1.xpose.msra.mxu0 %v496
    %500 = vmatprep.subr.mxu0 0.0
    %501 = vmatpush1.xpose.msra.mxu0 0.0
    %502 = vmatprep.subr.mxu0 0.0
    %503 = vmatpush1.xpose.msra.mxu0 0.0
    %504 = vmatprep.subr.mxu0 0.0
    %505 = vmatpush1.xpose.msra.mxu0 0.0
    %506 = vmatprep.subr.mxu0 0.0
    %507 = vmatpush1.xpose.msra.mxu0 0.0
    %508 = vmatprep.subr.mxu0 0.0
    %509 = vmatpush1.xpose.msra.mxu0 0.0
    %510 = vmatprep.subr.mxu0 0.0
    %511 = vmatpush1.xpose.msra.mxu0 0.0
    %512 = vmatprep.subr.mxu0 0.0
    %513 = vmatpush1.xpose.msra.mxu0 0.0
    %514 = vmatprep.subr.mxu0 0.0
    %515 = vmatpush1.xpose.msra.mxu0 0.0
    %516 = vmatprep.subr.mxu0 0.0
    %517 = vmatpush1.xpose.msra.mxu0 0.0
    %518 = vmatprep.subr.mxu0 0.0
    %519 = vmatpush1.xpose.msra.mxu0 0.0
    %520 = vmatprep.subr.mxu0 0.0
    %521 = vmatpush1.xpose.msra.mxu0 0.0
    %522 = vmatprep.subr.mxu0 0.0
    %523 = vmatpush1.xpose.msra.mxu0 0.0
    %524 = vmatprep.subr.mxu0 0.0
    %525 = vmatpush1.xpose.msra.mxu0 0.0
    %526 = vmatprep.subr.mxu0 0.0
    %527 = vmatpush1.xpose.msra.mxu0 0.0
    %528 = vmatprep.subr.mxu0 0.0
    %529 = vmatpush1.xpose.msra.mxu0 0.0
    %530 = vmatprep.subr.mxu0 0.0
    %531 = vmatpush1.xpose.msra.mxu0 0.0
    %532 = vmatprep.subr.mxu0 0.0
    %533 = vmatpush1.xpose.msra.mxu0 0.0
    %534 = vmatprep.subr.mxu0 0.0
    %535 = vmatpush1.xpose.msra.mxu0 0.0
    %536 = vmatprep.subr.mxu0 0.0
    %537 = vmatpush1.xpose.msra.mxu0 0.0
    %538 = vmatprep.subr.mxu0 0.0
    %539 = vmatpush1.xpose.msra.mxu0 0.0
    %540 = vmatprep.subr.mxu0 0.0
    %541 = vmatpush1.xpose.msra.mxu0 0.0
    %542 = vmatprep.subr.mxu0 0.0
    %543 = vmatpush1.xpose.msra.mxu0 0.0
    %544 = vmatprep.subr.mxu0 0.0
    %545 = vmatpush1.xpose.msra.mxu0 0.0
    %546 = vmatprep.subr.mxu0 0.0
    %547 = vmatpush1.xpose.msra.mxu0 0.0
    %548 = vmatprep.subr.mxu0 0.0
    %549 = vmatpush1.xpose.msra.mxu0 0.0
    %550 = vmatprep.subr.mxu0 0.0
    %551 = vmatpush1.xpose.msra.mxu0 0.0
    %552 = vmatprep.subr.mxu0 0.0
    %553 = vmatpush1.xpose.msra.mxu0 0.0
    %554 = vmatprep.subr.mxu0 0.0
    %555 = vmatpush1.xpose.msra.mxu0 0.0
    %556 = vmatprep.subr.mxu0 0.0
    %557 = vmatpush1.xpose.msra.mxu0 0.0
    %558 = vmatprep.subr.mxu0 0.0
    %559 = vmatpush1.xpose.msra.mxu0 0.0
    %560 = vmatprep.subr.mxu0 0.0
    %561 = vmatpush1.xpose.msra.mxu0 0.0
    %562 = vmatprep.mubr.f32.mxu0 0.0
    %563 = vmatmul.mubr.f32.gmra.mrb[0].mxu0 %v494
    %v564 = vpop.f32.mrb[0].mxu0
    %v565 = vadd.f32 %v152, %v564
    %v566 = vpop.f32.mrb[0].mxu0
    %567 = vdwg.mxu0
    %568 = vrot.lane.b32.xlu0 %v144, 120
    %v569 = vpop.permute.xlu0 %568
    %570 = vrot.lane.b32.xlu0 %v144, 88
    %v571 = vpop.permute.xlu0 %570
    %v572 = vsel %vm156, %v569, 0
    %v574 = vsel %vm156, %v571, 0
    %576 = vmatprep.subr.mxu0 0.0
    %577 = vmatpush1.xpose.msra.mxu0 %v574
    %578 = vmatprep.subr.mxu0 0.0
    %579 = vmatpush1.xpose.msra.mxu0 0.0
    %580 = vmatprep.subr.mxu0 0.0
    %581 = vmatpush1.xpose.msra.mxu0 0.0
    %582 = vmatprep.subr.mxu0 0.0
    %583 = vmatpush1.xpose.msra.mxu0 0.0
    %584 = vmatprep.subr.mxu0 0.0
    %585 = vmatpush1.xpose.msra.mxu0 0.0
    %586 = vmatprep.subr.mxu0 0.0
    %587 = vmatpush1.xpose.msra.mxu0 0.0
    %588 = vmatprep.subr.mxu0 0.0
    %589 = vmatpush1.xpose.msra.mxu0 0.0
    %590 = vmatprep.subr.mxu0 0.0
    %591 = vmatpush1.xpose.msra.mxu0 0.0
    %592 = vmatprep.subr.mxu0 0.0
    %593 = vmatpush1.xpose.msra.mxu0 0.0
    %594 = vmatprep.subr.mxu0 0.0
    %595 = vmatpush1.xpose.msra.mxu0 0.0
    %596 = vmatprep.subr.mxu0 0.0
    %597 = vmatpush1.xpose.msra.mxu0 0.0
    %598 = vmatprep.subr.mxu0 0.0
    %599 = vmatpush1.xpose.msra.mxu0 0.0
    %600 = vmatprep.subr.mxu0 0.0
    %601 = vmatpush1.xpose.msra.mxu0 0.0
    %602 = vmatprep.subr.mxu0 0.0
    %603 = vmatpush1.xpose.msra.mxu0 0.0
    %604 = vmatprep.subr.mxu0 0.0
    %605 = vmatpush1.xpose.msra.mxu0 0.0
    %606 = vmatprep.subr.mxu0 0.0
    %607 = vmatpush1.xpose.msra.mxu0 0.0
    %608 = vmatprep.subr.mxu0 0.0
    %609 = vmatpush1.xpose.msra.mxu0 0.0
    %610 = vmatprep.subr.mxu0 0.0
    %611 = vmatpush1.xpose.msra.mxu0 0.0
    %612 = vmatprep.subr.mxu0 0.0
    %613 = vmatpush1.xpose.msra.mxu0 0.0
    %614 = vmatprep.subr.mxu0 0.0
    %615 = vmatpush1.xpose.msra.mxu0 0.0
    %616 = vmatprep.subr.mxu0 0.0
    %617 = vmatpush1.xpose.msra.mxu0 0.0
    %618 = vmatprep.subr.mxu0 0.0
    %619 = vmatpush1.xpose.msra.mxu0 0.0
    %620 = vmatprep.subr.mxu0 0.0
    %621 = vmatpush1.xpose.msra.mxu0 0.0
    %622 = vmatprep.subr.mxu0 0.0
    %623 = vmatpush1.xpose.msra.mxu0 0.0
    %624 = vmatprep.subr.mxu0 0.0
    %625 = vmatpush1.xpose.msra.mxu0 0.0
    %626 = vmatprep.subr.mxu0 0.0
    %627 = vmatpush1.xpose.msra.mxu0 0.0
    %628 = vmatprep.subr.mxu0 0.0
    %629 = vmatpush1.xpose.msra.mxu0 0.0
    %630 = vmatprep.subr.mxu0 0.0
    %631 = vmatpush1.xpose.msra.mxu0 0.0
    %632 = vmatprep.subr.mxu0 0.0
    %633 = vmatpush1.xpose.msra.mxu0 0.0
    %634 = vmatprep.subr.mxu0 0.0
    %635 = vmatpush1.xpose.msra.mxu0 0.0
    %636 = vmatprep.subr.mxu0 0.0
    %637 = vmatpush1.xpose.msra.mxu0 0.0
    %638 = vmatprep.subr.mxu0 0.0
    %639 = vmatpush1.xpose.msra.mxu0 0.0
    %640 = vmatprep.mubr.f32.mxu0 0.0
    %641 = vmatmul.mubr.f32.gmra.mrb[0].mxu0 %v572
    %v642 = vpop.f32.mrb[0].mxu0
    %v643 = vadd.f32 %v152, %v642
    %v644 = vpop.f32.mrb[0].mxu0
    %645 = vdwg.mxu0
    %v646 = vsel %vm156, %v565, -inf
    %647 = vmax.xlane.f32.xlu0 %v646
    %v648 = vpop.xlane.xlu0 %647
    %v649 = vsel %vm156, %v643, -inf
    %650 = vmax.xlane.f32.xlu0 %v649
    %v651 = vpop.xlane.xlu0 %650
    %v652 = vsub.f32 %v565, %v648
    %v653 = vsub.f32 %v643, %v651
    %v654 = vmul.f32 %v652, 1.442695
    %v655 = vpow.pop %v654
    %v656 = vmul.f32 %v653, 1.442695
    %v657 = vpow.pop %v656
    %v658 = vsel %vm156, %v655, 0.0
    %659 = vadd.xlane.f32.xlu0 %v658
    %v660 = vpop.xlane.xlu0 %659
    %v661 = vsel %vm156, %v657, 0.0
    %662 = vadd.xlane.f32.xlu0 %v661
    %v663 = vpop.xlane.xlu0 %662
    %v664 = vrcp.pop %v660
    %v665 = vrcp.pop %v663
    %v666 = vmul.f32 %v660, %v664
    %v667 = vmul.f32 %v663, %v665
    %v668 = vsub.f32 2.0, %v666
    %v669 = vsub.f32 2.0, %v667
    %v670 = vmul.f32 %v664, %v668
    %v671 = vmul.f32 %v665, %v669
    %v672 = vmul.f32 %v655, %v670
    %v673 = vmul.f32 %v657, %v671
    %v675 = vsel %vm156, %v672, 0
    %677 = vmatprep.subr.mxu0 0.0
    %678 = vmatpush1.msra.mxu0 %v337
    %679 = vmatprep.subr.mxu0 0.0
    %680 = vmatpush1.msra.mxu0 0.0
    %681 = vmatprep.subr.mxu0 0.0
    %682 = vmatpush1.msra.mxu0 0.0
    %683 = vmatprep.subr.mxu0 0.0
    %684 = vmatpush1.msra.mxu0 0.0
    %685 = vmatprep.subr.mxu0 0.0
    %686 = vmatpush1.msra.mxu0 0.0
    %687 = vmatprep.subr.mxu0 0.0
    %688 = vmatpush1.msra.mxu0 0.0
    %689 = vmatprep.subr.mxu0 0.0
    %690 = vmatpush1.msra.mxu0 0.0
    %691 = vmatprep.subr.mxu0 0.0
    %692 = vmatpush1.msra.mxu0 0.0
    %693 = vmatprep.subr.mxu0 0.0
    %694 = vmatpush1.msra.mxu0 0.0
    %695 = vmatprep.subr.mxu0 0.0
    %696 = vmatpush1.msra.mxu0 0.0
    %697 = vmatprep.subr.mxu0 0.0
    %698 = vmatpush1.msra.mxu0 0.0
    %699 = vmatprep.subr.mxu0 0.0
    %700 = vmatpush1.msra.mxu0 0.0
    %701 = vmatprep.subr.mxu0 0.0
    %702 = vmatpush1.msra.mxu0 0.0
    %703 = vmatprep.subr.mxu0 0.0
    %704 = vmatpush1.msra.mxu0 0.0
    %705 = vmatprep.subr.mxu0 0.0
    %706 = vmatpush1.msra.mxu0 0.0
    %707 = vmatprep.subr.mxu0 0.0
    %708 = vmatpush1.msra.mxu0 0.0
    %709 = vmatprep.subr.mxu0 0.0
    %710 = vmatpush1.msra.mxu0 0.0
    %711 = vmatprep.subr.mxu0 0.0
    %712 = vmatpush1.msra.mxu0 0.0
    %713 = vmatprep.subr.mxu0 0.0
    %714 = vmatpush1.msra.mxu0 0.0
    %715 = vmatprep.subr.mxu0 0.0
    %716 = vmatpush1.msra.mxu0 0.0
    %717 = vmatprep.subr.mxu0 0.0
    %718 = vmatpush1.msra.mxu0 0.0
    %719 = vmatprep.subr.mxu0 0.0
    %720 = vmatpush1.msra.mxu0 0.0
    %721 = vmatprep.subr.mxu0 0.0
    %722 = vmatpush1.msra.mxu0 0.0
    %723 = vmatprep.subr.mxu0 0.0
    %724 = vmatpush1.msra.mxu0 0.0
    %725 = vmatprep.subr.mxu0 0.0
    %726 = vmatpush1.msra.mxu0 0.0
    %727 = vmatprep.subr.mxu0 0.0
    %728 = vmatpush1.msra.mxu0 0.0
    %729 = vmatprep.subr.mxu0 0.0
    %730 = vmatpush1.msra.mxu0 0.0
    %731 = vmatprep.subr.mxu0 0.0
    %732 = vmatpush1.msra.mxu0 0.0
    %733 = vmatprep.subr.mxu0 0.0
    %734 = vmatpush1.msra.mxu0 0.0
    %735 = vmatprep.subr.mxu0 0.0
    %736 = vmatpush1.msra.mxu0 0.0
    %737 = vmatprep.subr.mxu0 0.0
    %738 = vmatpush1.msra.mxu0 0.0
    %739 = vmatprep.subr.mxu0 0.0
    %740 = vmatpush1.msra.mxu0 0.0
    %741 = vmatprep.mubr.f32.mxu0 0.0
    %742 = vmatmul.mubr.f32.gmra.mrb[0].mxu0 %v675
    %v743 = vpop.f32.mrb[0].mxu0
    %v744 = vadd.f32 0.0, %v743
    %v745 = vpop.f32.mrb[0].mxu0
    %746 = vdwg.mxu0
    %v748 = vsel %vm156, %v673, 0
    %750 = vmatprep.subr.mxu0 0.0
    %751 = vmatpush1.msra.mxu0 %v413
    %752 = vmatprep.subr.mxu0 0.0
    %753 = vmatpush1.msra.mxu0 0.0
    %754 = vmatprep.subr.mxu0 0.0
    %755 = vmatpush1.msra.mxu0 0.0
    %756 = vmatprep.subr.mxu0 0.0
    %757 = vmatpush1.msra.mxu0 0.0
    %758 = vmatprep.subr.mxu0 0.0
    %759 = vmatpush1.msra.mxu0 0.0
    %760 = vmatprep.subr.mxu0 0.0
    %761 = vmatpush1.msra.mxu0 0.0
    %762 = vmatprep.subr.mxu0 0.0
    %763 = vmatpush1.msra.mxu0 0.0
    %764 = vmatprep.subr.mxu0 0.0
    %765 = vmatpush1.msra.mxu0 0.0
    %766 = vmatprep.subr.mxu0 0.0
    %767 = vmatpush1.msra.mxu0 0.0
    %768 = vmatprep.subr.mxu0 0.0
    %769 = vmatpush1.msra.mxu0 0.0
    %770 = vmatprep.subr.mxu0 0.0
    %771 = vmatpush1.msra.mxu0 0.0
    %772 = vmatprep.subr.mxu0 0.0
    %773 = vmatpush1.msra.mxu0 0.0
    %774 = vmatprep.subr.mxu0 0.0
    %775 = vmatpush1.msra.mxu0 0.0
    %776 = vmatprep.subr.mxu0 0.0
    %777 = vmatpush1.msra.mxu0 0.0
    %778 = vmatprep.subr.mxu0 0.0
    %779 = vmatpush1.msra.mxu0 0.0
    %780 = vmatprep.subr.mxu0 0.0
    %781 = vmatpush1.msra.mxu0 0.0
    %782 = vmatprep.subr.mxu0 0.0
    %783 = vmatpush1.msra.mxu0 0.0
    %784 = vmatprep.subr.mxu0 0.0
    %785 = vmatpush1.msra.mxu0 0.0
    %786 = vmatprep.subr.mxu0 0.0
    %787 = vmatpush1.msra.mxu0 0.0
    %788 = vmatprep.subr.mxu0 0.0
    %789 = vmatpush1.msra.mxu0 0.0
    %790 = vmatprep.subr.mxu0 0.0
    %791 = vmatpush1.msra.mxu0 0.0
    %792 = vmatprep.subr.mxu0 0.0
    %793 = vmatpush1.msra.mxu0 0.0
    %794 = vmatprep.subr.mxu0 0.0
    %795 = vmatpush1.msra.mxu0 0.0
    %796 = vmatprep.subr.mxu0 0.0
    %797 = vmatpush1.msra.mxu0 0.0
    %798 = vmatprep.subr.mxu0 0.0
    %799 = vmatpush1.msra.mxu0 0.0
    %800 = vmatprep.subr.mxu0 0.0
    %801 = vmatpush1.msra.mxu0 0.0
    %802 = vmatprep.subr.mxu0 0.0
    %803 = vmatpush1.msra.mxu0 0.0
    %804 = vmatprep.subr.mxu0 0.0
    %805 = vmatpush1.msra.mxu0 0.0
    %806 = vmatprep.subr.mxu0 0.0
    %807 = vmatpush1.msra.mxu0 0.0
    %808 = vmatprep.subr.mxu0 0.0
    %809 = vmatpush1.msra.mxu0 0.0
    %810 = vmatprep.subr.mxu0 0.0
    %811 = vmatpush1.msra.mxu0 0.0
    %812 = vmatprep.subr.mxu0 0.0
    %813 = vmatpush1.msra.mxu0 0.0
    %814 = vmatprep.mubr.f32.mxu0 0.0
    %815 = vmatmul.mubr.f32.gmra.mrb[0].mxu0 %v748
    %v816 = vpop.f32.mrb[0].mxu0
    %v817 = vadd.f32 0.0, %v816
    %v818 = vpop.f32.mrb[0].mxu0
    %819 = vdwg.mxu0
    %v820 = vadd.f32 %v488, %v744
    %v821 = vadd.f32 %v489, %v817
    %822 = vrot.lane.b32.xlu0 %v139, 112
    %v823 = vpop.permute.xlu0 %822
    %824 = vrot.lane.b32.xlu0 %v139, 80
    %v825 = vpop.permute.xlu0 %824
    %v826 = vsel %vm156, %v823, 0
    %v828 = vsel %vm156, %v825, 0
    %830 = vmatprep.subr.mxu0 0.0
    %831 = vmatpush1.xpose.msra.mxu0 %v828
    %832 = vmatprep.subr.mxu0 0.0
    %833 = vmatpush1.xpose.msra.mxu0 0.0
    %834 = vmatprep.subr.mxu0 0.0
    %835 = vmatpush1.xpose.msra.mxu0 0.0
    %836 = vmatprep.subr.mxu0 0.0
    %837 = vmatpush1.xpose.msra.mxu0 0.0
    %838 = vmatprep.subr.mxu0 0.0
    %839 = vmatpush1.xpose.msra.mxu0 0.0
    %840 = vmatprep.subr.mxu0 0.0
    %841 = vmatpush1.xpose.msra.mxu0 0.0
    %842 = vmatprep.subr.mxu0 0.0
    %843 = vmatpush1.xpose.msra.mxu0 0.0
    %844 = vmatprep.subr.mxu0 0.0
    %845 = vmatpush1.xpose.msra.mxu0 0.0
    %846 = vmatprep.subr.mxu0 0.0
    %847 = vmatpush1.xpose.msra.mxu0 0.0
    %848 = vmatprep.subr.mxu0 0.0
    %849 = vmatpush1.xpose.msra.mxu0 0.0
    %850 = vmatprep.subr.mxu0 0.0
    %851 = vmatpush1.xpose.msra.mxu0 0.0
    %852 = vmatprep.subr.mxu0 0.0
    %853 = vmatpush1.xpose.msra.mxu0 0.0
    %854 = vmatprep.subr.mxu0 0.0
    %855 = vmatpush1.xpose.msra.mxu0 0.0
    %856 = vmatprep.subr.mxu0 0.0
    %857 = vmatpush1.xpose.msra.mxu0 0.0
    %858 = vmatprep.subr.mxu0 0.0
    %859 = vmatpush1.xpose.msra.mxu0 0.0
    %860 = vmatprep.subr.mxu0 0.0
    %861 = vmatpush1.xpose.msra.mxu0 0.0
    %862 = vmatprep.subr.mxu0 0.0
    %863 = vmatpush1.xpose.msra.mxu0 0.0
    %864 = vmatprep.subr.mxu0 0.0
    %865 = vmatpush1.xpose.msra.mxu0 0.0
    %866 = vmatprep.subr.mxu0 0.0
    %867 = vmatpush1.xpose.msra.mxu0 0.0
    %868 = vmatprep.subr.mxu0 0.0
    %869 = vmatpush1.xpose.msra.mxu0 0.0
    %870 = vmatprep.subr.mxu0 0.0
    %871 = vmatpush1.xpose.msra.mxu0 0.0
    %872 = vmatprep.subr.mxu0 0.0
    %873 = vmatpush1.xpose.msra.mxu0 0.0
    %874 = vmatprep.subr.mxu0 0.0
    %875 = vmatpush1.xpose.msra.mxu0 0.0
    %876 = vmatprep.subr.mxu0 0.0
    %877 = vmatpush1.xpose.msra.mxu0 0.0
    %878 = vmatprep.subr.mxu0 0.0
    %879 = vmatpush1.xpose.msra.mxu0 0.0
    %880 = vmatprep.subr.mxu0 0.0
    %881 = vmatpush1.xpose.msra.mxu0 0.0
    %882 = vmatprep.subr.mxu0 0.0
    %883 = vmatpush1.xpose.msra.mxu0 0.0
    %884 = vmatprep.subr.mxu0 0.0
    %885 = vmatpush1.xpose.msra.mxu0 0.0
    %886 = vmatprep.subr.mxu0 0.0
    %887 = vmatpush1.xpose.msra.mxu0 0.0
    %888 = vmatprep.subr.mxu0 0.0
    %889 = vmatpush1.xpose.msra.mxu0 0.0
    %890 = vmatprep.subr.mxu0 0.0
    %891 = vmatpush1.xpose.msra.mxu0 0.0
    %892 = vmatprep.subr.mxu0 0.0
    %893 = vmatpush1.xpose.msra.mxu0 0.0
    %894 = vmatprep.mubr.f32.mxu0 0.0
    %895 = vmatmul.mubr.f32.gmra.mrb[0].mxu0 %v826
    %v896 = vpop.f32.mrb[0].mxu0
    %v897 = vadd.f32 %v152, %v896
    %v898 = vpop.f32.mrb[0].mxu0
    %899 = vdwg.mxu0
    %900 = vrot.lane.b32.xlu0 %v144, 112
    %v901 = vpop.permute.xlu0 %900
    %902 = vrot.lane.b32.xlu0 %v144, 80
    %v903 = vpop.permute.xlu0 %902
    %v904 = vsel %vm156, %v901, 0
    %v906 = vsel %vm156, %v903, 0
    %908 = vmatprep.subr.mxu0 0.0
    %909 = vmatpush1.xpose.msra.mxu0 %v906
    %910 = vmatprep.subr.mxu0 0.0
    %911 = vmatpush1.xpose.msra.mxu0 0.0
    %912 = vmatprep.subr.mxu0 0.0
    %913 = vmatpush1.xpose.msra.mxu0 0.0
    %914 = vmatprep.subr.mxu0 0.0
    %915 = vmatpush1.xpose.msra.mxu0 0.0
    %916 = vmatprep.subr.mxu0 0.0
    %917 = vmatpush1.xpose.msra.mxu0 0.0
    %918 = vmatprep.subr.mxu0 0.0
    %919 = vmatpush1.xpose.msra.mxu0 0.0
    %920 = vmatprep.subr.mxu0 0.0
    %921 = vmatpush1.xpose.msra.mxu0 0.0
    %922 = vmatprep.subr.mxu0 0.0
    %923 = vmatpush1.xpose.msra.mxu0 0.0
    %924 = vmatprep.subr.mxu0 0.0
    %925 = vmatpush1.xpose.msra.mxu0 0.0
    %926 = vmatprep.subr.mxu0 0.0
    %927 = vmatpush1.xpose.msra.mxu0 0.0
    %928 = vmatprep.subr.mxu0 0.0
    %929 = vmatpush1.xpose.msra.mxu0 0.0
    %930 = vmatprep.subr.mxu0 0.0
    %931 = vmatpush1.xpose.msra.mxu0 0.0
    %932 = vmatprep.subr.mxu0 0.0
    %933 = vmatpush1.xpose.msra.mxu0 0.0
    %934 = vmatprep.subr.mxu0 0.0
    %935 = vmatpush1.xpose.msra.mxu0 0.0
    %936 = vmatprep.subr.mxu0 0.0
    %937 = vmatpush1.xpose.msra.mxu0 0.0
    %938 = vmatprep.subr.mxu0 0.0
    %939 = vmatpush1.xpose.msra.mxu0 0.0
    %940 = vmatprep.subr.mxu0 0.0
    %941 = vmatpush1.xpose.msra.mxu0 0.0
    %942 = vmatprep.subr.mxu0 0.0
    %943 = vmatpush1.xpose.msra.mxu0 0.0
    %944 = vmatprep.subr.mxu0 0.0
    %945 = vmatpush1.xpose.msra.mxu0 0.0
    %946 = vmatprep.subr.mxu0 0.0
    %947 = vmatpush1.xpose.msra.mxu0 0.0
    %948 = vmatprep.subr.mxu0 0.0
    %949 = vmatpush1.xpose.msra.mxu0 0.0
    %950 = vmatprep.subr.mxu0 0.0
    %951 = vmatpush1.xpose.msra.mxu0 0.0
    %952 = vmatprep.subr.mxu0 0.0
    %953 = vmatpush1.xpose.msra.mxu0 0.0
    %954 = vmatprep.subr.mxu0 0.0
    %955 = vmatpush1.xpose.msra.mxu0 0.0
    %956 = vmatprep.subr.mxu0 0.0
    %957 = vmatpush1.xpose.msra.mxu0 0.0
    %958 = vmatprep.subr.mxu0 0.0
    %959 = vmatpush1.xpose.msra.mxu0 0.0
    %960 = vmatprep.subr.mxu0 0.0
    %961 = vmatpush1.xpose.msra.mxu0 0.0
    %962 = vmatprep.subr.mxu0 0.0
    %963 = vmatpush1.xpose.msra.mxu0 0.0
    %964 = vmatprep.subr.mxu0 0.0
    %965 = vmatpush1.xpose.msra.mxu0 0.0
    %966 = vmatprep.subr.mxu0 0.0
    %967 = vmatpush1.xpose.msra.mxu0 0.0
    %968 = vmatprep.subr.mxu0 0.0
    %969 = vmatpush1.xpose.msra.mxu0 0.0
    %970 = vmatprep.subr.mxu0 0.0
    %971 = vmatpush1.xpose.msra.mxu0 0.0
    %972 = vmatprep.mubr.f32.mxu0 0.0
    %973 = vmatmul.mubr.f32.gmra.mrb[0].mxu0 %v904
    %v974 = vpop.f32.mrb[0].mxu0
    %v975 = vadd.f32 %v152, %v974
    %v976 = vpop.f32.mrb[0].mxu0
    %977 = vdwg.mxu0
    %v978 = vsel %vm156, %v897, -inf
    %979 = vmax.xlane.f32.xlu0 %v978
    %v980 = vpop.xlane.xlu0 %979
    %v981 = vsel %vm156, %v975, -inf
    %982 = vmax.xlane.f32.xlu0 %v981
    %v983 = vpop.xlane.xlu0 %982
    %v984 = vsub.f32 %v897, %v980
    %v985 = vsub.f32 %v975, %v983
    %v986 = vmul.f32 %v984, 1.442695
    %v987 = vpow.pop %v986
    %v988 = vmul.f32 %v985, 1.442695
    %v989 = vpow.pop %v988
    %v990 = vsel %vm156, %v987, 0.0
    %991 = vadd.xlane.f32.xlu0 %v990
    %v992 = vpop.xlane.xlu0 %991
    %v993 = vsel %vm156, %v989, 0.0
    %994 = vadd.xlane.f32.xlu0 %v993
    %v995 = vpop.xlane.xlu0 %994
    %v996 = vrcp.pop %v992
    %v997 = vrcp.pop %v995
    %v998 = vmul.f32 %v992, %v996
    %v999 = vmul.f32 %v995, %v997
    %v1000 = vsub.f32 2.0, %v998
    %v1001 = vsub.f32 2.0, %v999
    %v1002 = vmul.f32 %v996, %v1000
    %v1003 = vmul.f32 %v997, %v1001
    %v1004 = vmul.f32 %v987, %v1002
    %v1005 = vmul.f32 %v989, %v1003
    %v1007 = vsel %vm156, %v1004, 0
    %1009 = vmatprep.subr.mxu0 0.0
    %1010 = vmatpush1.msra.mxu0 %v337
    %1011 = vmatprep.subr.mxu0 0.0
    %1012 = vmatpush1.msra.mxu0 0.0
    %1013 = vmatprep.subr.mxu0 0.0
    %1014 = vmatpush1.msra.mxu0 0.0
    %1015 = vmatprep.subr.mxu0 0.0
    %1016 = vmatpush1.msra.mxu0 0.0
    %1017 = vmatprep.subr.mxu0 0.0
    %1018 = vmatpush1.msra.mxu0 0.0
    %1019 = vmatprep.subr.mxu0 0.0
    %1020 = vmatpush1.msra.mxu0 0.0
    %1021 = vmatprep.subr.mxu0 0.0
    %1022 = vmatpush1.msra.mxu0 0.0
    %1023 = vmatprep.subr.mxu0 0.0
    %1024 = vmatpush1.msra.mxu0 0.0
    %1025 = vmatprep.subr.mxu0 0.0
    %1026 = vmatpush1.msra.mxu0 0.0
    %1027 = vmatprep.subr.mxu0 0.0
    %1028 = vmatpush1.msra.mxu0 0.0
    %1029 = vmatprep.subr.mxu0 0.0
    %1030 = vmatpush1.msra.mxu0 0.0
    %1031 = vmatprep.subr.mxu0 0.0
    %1032 = vmatpush1.msra.mxu0 0.0
    %1033 = vmatprep.subr.mxu0 0.0
    %1034 = vmatpush1.msra.mxu0 0.0
    %1035 = vmatprep.subr.mxu0 0.0
    %1036 = vmatpush1.msra.mxu0 0.0
    %1037 = vmatprep.subr.mxu0 0.0
    %1038 = vmatpush1.msra.mxu0 0.0
    %1039 = vmatprep.subr.mxu0 0.0
    %1040 = vmatpush1.msra.mxu0 0.0
    %1041 = vmatprep.subr.mxu0 0.0
    %1042 = vmatpush1.msra.mxu0 0.0
    %1043 = vmatprep.subr.mxu0 0.0
    %1044 = vmatpush1.msra.mxu0 0.0
    %1045 = vmatprep.subr.mxu0 0.0
    %1046 = vmatpush1.msra.mxu0 0.0
    %1047 = vmatprep.subr.mxu0 0.0
    %1048 = vmatpush1.msra.mxu0 0.0
    %1049 = vmatprep.subr.mxu0 0.0
    %1050 = vmatpush1.msra.mxu0 0.0
    %1051 = vmatprep.subr.mxu0 0.0
    %1052 = vmatpush1.msra.mxu0 0.0
    %1053 = vmatprep.subr.mxu0 0.0
    %1054 = vmatpush1.msra.mxu0 0.0
    %1055 = vmatprep.subr.mxu0 0.0
    %1056 = vmatpush1.msra.mxu0 0.0
    %1057 = vmatprep.subr.mxu0 0.0
    %1058 = vmatpush1.msra.mxu0 0.0
    %1059 = vmatprep.subr.mxu0 0.0
    %1060 = vmatpush1.msra.mxu0 0.0
    %1061 = vmatprep.subr.mxu0 0.0
    %1062 = vmatpush1.msra.mxu0 0.0
    %1063 = vmatprep.subr.mxu0 0.0
    %1064 = vmatpush1.msra.mxu0 0.0
    %1065 = vmatprep.subr.mxu0 0.0
    %1066 = vmatpush1.msra.mxu0 0.0
    %1067 = vmatprep.subr.mxu0 0.0
    %1068 = vmatpush1.msra.mxu0 0.0
    %1069 = vmatprep.subr.mxu0 0.0
    %1070 = vmatpush1.msra.mxu0 0.0
    %1071 = vmatprep.subr.mxu0 0.0
    %1072 = vmatpush1.msra.mxu0 0.0
    %1073 = vmatprep.mubr.f32.mxu0 0.0
    %1074 = vmatmul.mubr.f32.gmra.mrb[0].mxu0 %v1007
    %v1075 = vpop.f32.mrb[0].mxu0
    %v1076 = vadd.f32 0.0, %v1075
    %v1077 = vpop.f32.mrb[0].mxu0
    %1078 = vdwg.mxu0
    %v1080 = vsel %vm156, %v1005, 0
    %1082 = vmatprep.subr.mxu0 0.0
    %1083 = vmatpush1.msra.mxu0 %v413
    %1084 = vmatprep.subr.mxu0 0.0
    %1085 = vmatpush1.msra.mxu0 0.0
    %1086 = vmatprep.subr.mxu0 0.0
    %1087 = vmatpush1.msra.mxu0 0.0
    %1088 = vmatprep.subr.mxu0 0.0
    %1089 = vmatpush1.msra.mxu0 0.0
    %1090 = vmatprep.subr.mxu0 0.0
    %1091 = vmatpush1.msra.mxu0 0.0
    %1092 = vmatprep.subr.mxu0 0.0
    %1093 = vmatpush1.msra.mxu0 0.0
    %1094 = vmatprep.subr.mxu0 0.0
    %1095 = vmatpush1.msra.mxu0 0.0
    %1096 = vmatprep.subr.mxu0 0.0
    %1097 = vmatpush1.msra.mxu0 0.0
    %1098 = vmatprep.subr.mxu0 0.0
    %1099 = vmatpush1.msra.mxu0 0.0
    %1100 = vmatprep.subr.mxu0 0.0
    %1101 = vmatpush1.msra.mxu0 0.0
    %1102 = vmatprep.subr.mxu0 0.0
    %1103 = vmatpush1.msra.mxu0 0.0
    %1104 = vmatprep.subr.mxu0 0.0
    %1105 = vmatpush1.msra.mxu0 0.0
    %1106 = vmatprep.subr.mxu0 0.0
    %1107 = vmatpush1.msra.mxu0 0.0
    %1108 = vmatprep.subr.mxu0 0.0
    %1109 = vmatpush1.msra.mxu0 0.0
    %1110 = vmatprep.subr.mxu0 0.0
    %1111 = vmatpush1.msra.mxu0 0.0
    %1112 = vmatprep.subr.mxu0 0.0
    %1113 = vmatpush1.msra.mxu0 0.0
    %1114 = vmatprep.subr.mxu0 0.0
    %1115 = vmatpush1.msra.mxu0 0.0
    %1116 = vmatprep.subr.mxu0 0.0
    %1117 = vmatpush1.msra.mxu0 0.0
    %1118 = vmatprep.subr.mxu0 0.0
    %1119 = vmatpush1.msra.mxu0 0.0
    %1120 = vmatprep.subr.mxu0 0.0
    %1121 = vmatpush1.msra.mxu0 0.0
    %1122 = vmatprep.subr.mxu0 0.0
    %1123 = vmatpush1.msra.mxu0 0.0
    %1124 = vmatprep.subr.mxu0 0.0
    %1125 = vmatpush1.msra.mxu0 0.0
    %1126 = vmatprep.subr.mxu0 0.0
    %1127 = vmatpush1.msra.mxu0 0.0
    %1128 = vmatprep.subr.mxu0 0.0
    %1129 = vmatpush1.msra.mxu0 0.0
    %1130 = vmatprep.subr.mxu0 0.0
    %1131 = vmatpush1.msra.mxu0 0.0
    %1132 = vmatprep.subr.mxu0 0.0
    %1133 = vmatpush1.msra.mxu0 0.0
    %1134 = vmatprep.subr.mxu0 0.0
    %1135 = vmatpush1.msra.mxu0 0.0
    %1136 = vmatprep.subr.mxu0 0.0
    %1137 = vmatpush1.msra.mxu0 0.0
    %1138 = vmatprep.subr.mxu0 0.0
    %1139 = vmatpush1.msra.mxu0 0.0
    %1140 = vmatprep.subr.mxu0 0.0
    %1141 = vmatpush1.msra.mxu0 0.0
    %1142 = vmatprep.subr.mxu0 0.0
    %1143 = vmatpush1.msra.mxu0 0.0
    %1144 = vmatprep.subr.mxu0 0.0
    %1145 = vmatpush1.msra.mxu0 0.0
    %1146 = vmatprep.mubr.f32.mxu0 0.0
    %1147 = vmatmul.mubr.f32.gmra.mrb[0].mxu0 %v1080
    %v1148 = vpop.f32.mrb[0].mxu0
    %v1149 = vadd.f32 0.0, %v1148
    %v1150 = vpop.f32.mrb[0].mxu0
    %1151 = vdwg.mxu0
    %v1152 = vadd.f32 %v820, %v1076
    %v1153 = vadd.f32 %v821, %v1149
    %1154 = vrot.lane.b32.xlu0 %v139, 104
    %v1155 = vpop.permute.xlu0 %1154
    %1156 = vrot.lane.b32.xlu0 %v139, 72
    %v1157 = vpop.permute.xlu0 %1156
    %v1158 = vsel %vm156, %v1155, 0
    %v1160 = vsel %vm156, %v1157, 0
    %1162 = vmatprep.subr.mxu0 0.0
    %1163 = vmatpush1.xpose.msra.mxu0 %v1160
    %1164 = vmatprep.subr.mxu0 0.0
    %1165 = vmatpush1.xpose.msra.mxu0 0.0
    %1166 = vmatprep.subr.mxu0 0.0
    %1167 = vmatpush1.xpose.msra.mxu0 0.0
    %1168 = vmatprep.subr.mxu0 0.0
    %1169 = vmatpush1.xpose.msra.mxu0 0.0
    %1170 = vmatprep.subr.mxu0 0.0
    %1171 = vmatpush1.xpose.msra.mxu0 0.0
    %1172 = vmatprep.subr.mxu0 0.0
    %1173 = vmatpush1.xpose.msra.mxu0 0.0
    %1174 = vmatprep.subr.mxu0 0.0
    %1175 = vmatpush1.xpose.msra.mxu0 0.0
    %1176 = vmatprep.subr.mxu0 0.0
    %1177 = vmatpush1.xpose.msra.mxu0 0.0
    %1178 = vmatprep.subr.mxu0 0.0
    %1179 = vmatpush1.xpose.msra.mxu0 0.0
    %1180 = vmatprep.subr.mxu0 0.0
    %1181 = vmatpush1.xpose.msra.mxu0 0.0
    %1182 = vmatprep.subr.mxu0 0.0
    %1183 = vmatpush1.xpose.msra.mxu0 0.0
    %1184 = vmatprep.subr.mxu0 0.0
    %1185 = vmatpush1.xpose.msra.mxu0 0.0
    %1186 = vmatprep.subr.mxu0 0.0
    %1187 = vmatpush1.xpose.msra.mxu0 0.0
    %1188 = vmatprep.subr.mxu0 0.0
    %1189 = vmatpush1.xpose.msra.mxu0 0.0
    %1190 = vmatprep.subr.mxu0 0.0
    %1191 = vmatpush1.xpose.msra.mxu0 0.0
    %1192 = vmatprep.subr.mxu0 0.0
    %1193 = vmatpush1.xpose.msra.mxu0 0.0
    %1194 = vmatprep.subr.mxu0 0.0
    %1195 = vmatpush1.xpose.msra.mxu0 0.0
    %1196 = vmatprep.subr.mxu0 0.0
    %1197 = vmatpush1.xpose.msra.mxu0 0.0
    %1198 = vmatprep.subr.mxu0 0.0
    %1199 = vmatpush1.xpose.msra.mxu0 0.0
    %1200 = vmatprep.subr.mxu0 0.0
    %1201 = vmatpush1.xpose.msra.mxu0 0.0
    %1202 = vmatprep.subr.mxu0 0.0
    %1203 = vmatpush1.xpose.msra.mxu0 0.0
    %1204 = vmatprep.subr.mxu0 0.0
    %1205 = vmatpush1.xpose.msra.mxu0 0.0
    %1206 = vmatprep.subr.mxu0 0.0
    %1207 = vmatpush1.xpose.msra.mxu0 0.0
    %1208 = vmatprep.subr.mxu0 0.0
    %1209 = vmatpush1.xpose.msra.mxu0 0.0
    %1210 = vmatprep.subr.mxu0 0.0
    %1211 = vmatpush1.xpose.msra.mxu0 0.0
    %1212 = vmatprep.subr.mxu0 0.0
    %1213 = vmatpush1.xpose.msra.mxu0 0.0
    %1214 = vmatprep.subr.mxu0 0.0
    %1215 = vmatpush1.xpose.msra.mxu0 0.0
    %1216 = vmatprep.subr.mxu0 0.0
    %1217 = vmatpush1.xpose.msra.mxu0 0.0
    %1218 = vmatprep.subr.mxu0 0.0
    %1219 = vmatpush1.xpose.msra.mxu0 0.0
    %1220 = vmatprep.subr.mxu0 0.0
    %1221 = vmatpush1.xpose.msra.mxu0 0.0
    %1222 = vmatprep.subr.mxu0 0.0
    %1223 = vmatpush1.xpose.msra.mxu0 0.0
    %1224 = vmatprep.subr.mxu0 0.0
    %1225 = vmatpush1.xpose.msra.mxu0 0.0
    %1226 = vmatprep.mubr.f32.mxu0 0.0
    %1227 = vmatmul.mubr.f32.gmra.mrb[0].mxu0 %v1158
    %v1228 = vpop.f32.mrb[0].mxu0
    %v1229 = vadd.f32 %v152, %v1228
    %v1230 = vpop.f32.mrb[0].mxu0
    %1231 = vdwg.mxu0
    %1232 = vrot.lane.b32.xlu0 %v144, 104
    %v1233 = vpop.permute.xlu0 %1232
    %1234 = vrot.lane.b32.xlu0 %v144, 72
    %v1235 = vpop.permute.xlu0 %1234
    %v1236 = vsel %vm156, %v1233, 0
    %v1238 = vsel %vm156, %v1235, 0
    %1240 = vmatprep.subr.mxu0 0.0
    %1241 = vmatpush1.xpose.msra.mxu0 %v1238
    %1242 = vmatprep.subr.mxu0 0.0
    %1243 = vmatpush1.xpose.msra.mxu0 0.0
    %1244 = vmatprep.subr.mxu0 0.0
    %1245 = vmatpush1.xpose.msra.mxu0 0.0
    %1246 = vmatprep.subr.mxu0 0.0
    %1247 = vmatpush1.xpose.msra.mxu0 0.0
    %1248 = vmatprep.subr.mxu0 0.0
    %1249 = vmatpush1.xpose.msra.mxu0 0.0
    %1250 = vmatprep.subr.mxu0 0.0
    %1251 = vmatpush1.xpose.msra.mxu0 0.0
    %1252 = vmatprep.subr.mxu0 0.0
    %1253 = vmatpush1.xpose.msra.mxu0 0.0
    %1254 = vmatprep.subr.mxu0 0.0
    %1255 = vmatpush1.xpose.msra.mxu0 0.0
    %1256 = vmatprep.subr.mxu0 0.0
    %1257 = vmatpush1.xpose.msra.mxu0 0.0
    %1258 = vmatprep.subr.mxu0 0.0
    %1259 = vmatpush1.xpose.msra.mxu0 0.0
    %1260 = vmatprep.subr.mxu0 0.0
    %1261 = vmatpush1.xpose.msra.mxu0 0.0
    %1262 = vmatprep.subr.mxu0 0.0
    %1263 = vmatpush1.xpose.msra.mxu0 0.0
    %1264 = vmatprep.subr.mxu0 0.0
    %1265 = vmatpush1.xpose.msra.mxu0 0.0
    %1266 = vmatprep.subr.mxu0 0.0
    %1267 = vmatpush1.xpose.msra.mxu0 0.0
    %1268 = vmatprep.subr.mxu0 0.0
    %1269 = vmatpush1.xpose.msra.mxu0 0.0
    %1270 = vmatprep.subr.mxu0 0.0
    %1271 = vmatpush1.xpose.msra.mxu0 0.0
    %1272 = vmatprep.subr.mxu0 0.0
    %1273 = vmatpush1.xpose.msra.mxu0 0.0
    %1274 = vmatprep.subr.mxu0 0.0
    %1275 = vmatpush1.xpose.msra.mxu0 0.0
    %1276 = vmatprep.subr.mxu0 0.0
    %1277 = vmatpush1.xpose.msra.mxu0 0.0
    %1278 = vmatprep.subr.mxu0 0.0
    %1279 = vmatpush1.xpose.msra.mxu0 0.0
    %1280 = vmatprep.subr.mxu0 0.0
    %1281 = vmatpush1.xpose.msra.mxu0 0.0
    %1282 = vmatprep.subr.mxu0 0.0
    %1283 = vmatpush1.xpose.msra.mxu0 0.0
    %1284 = vmatprep.subr.mxu0 0.0
    %1285 = vmatpush1.xpose.msra.mxu0 0.0
    %1286 = vmatprep.subr.mxu0 0.0
    %1287 = vmatpush1.xpose.msra.mxu0 0.0
    %1288 = vmatprep.subr.mxu0 0.0
    %1289 = vmatpush1.xpose.msra.mxu0 0.0
    %1290 = vmatprep.subr.mxu0 0.0
    %1291 = vmatpush1.xpose.msra.mxu0 0.0
    %1292 = vmatprep.subr.mxu0 0.0
    %1293 = vmatpush1.xpose.msra.mxu0 0.0
    %1294 = vmatprep.subr.mxu0 0.0
    %1295 = vmatpush1.xpose.msra.mxu0 0.0
    %1296 = vmatprep.subr.mxu0 0.0
    %1297 = vmatpush1.xpose.msra.mxu0 0.0
    %1298 = vmatprep.subr.mxu0 0.0
    %1299 = vmatpush1.xpose.msra.mxu0 0.0
    %1300 = vmatprep.subr.mxu0 0.0
    %1301 = vmatpush1.xpose.msra.mxu0 0.0
    %1302 = vmatprep.subr.mxu0 0.0
    %1303 = vmatpush1.xpose.msra.mxu0 0.0
    %1304 = vmatprep.mubr.f32.mxu0 0.0
    %1305 = vmatmul.mubr.f32.gmra.mrb[0].mxu0 %v1236
    %v1306 = vpop.f32.mrb[0].mxu0
    %v1307 = vadd.f32 %v152, %v1306
    %v1308 = vpop.f32.mrb[0].mxu0
    %1309 = vdwg.mxu0
    %v1310 = vsel %vm156, %v1229, -inf
    %1311 = vmax.xlane.f32.xlu0 %v1310
    %v1312 = vpop.xlane.xlu0 %1311
    %v1313 = vsel %vm156, %v1307, -inf
    %1314 = vmax.xlane.f32.xlu0 %v1313
    %v1315 = vpop.xlane.xlu0 %1314
    %v1316 = vsub.f32 %v1229, %v1312
    %v1317 = vsub.f32 %v1307, %v1315
    %v1318 = vmul.f32 %v1316, 1.442695
    %v1319 = vpow.pop %v1318
    %v1320 = vmul.f32 %v1317, 1.442695
    %v1321 = vpow.pop %v1320
    %v1322 = vsel %vm156, %v1319, 0.0
    %1323 = vadd.xlane.f32.xlu0 %v1322
    %v1324 = vpop.xlane.xlu0 %1323
    %v1325 = vsel %vm156, %v1321, 0.0
    %1326 = vadd.xlane.f32.xlu0 %v1325
    %v1327 = vpop.xlane.xlu0 %1326
    %v1328 = vrcp.pop %v1324
    %v1329 = vrcp.pop %v1327
    %v1330 = vmul.f32 %v1324, %v1328
    %v1331 = vmul.f32 %v1327, %v1329
    %v1332 = vsub.f32 2.0, %v1330
    %v1333 = vsub.f32 2.0, %v1331
    %v1334 = vmul.f32 %v1328, %v1332
    %v1335 = vmul.f32 %v1329, %v1333
    %v1336 = vmul.f32 %v1319, %v1334
    %v1337 = vmul.f32 %v1321, %v1335
    %v1339 = vsel %vm156, %v1336, 0
    %1341 = vmatprep.subr.mxu0 0.0
    %1342 = vmatpush1.msra.mxu0 %v337
    %1343 = vmatprep.subr.mxu0 0.0
    %1344 = vmatpush1.msra.mxu0 0.0
    %1345 = vmatprep.subr.mxu0 0.0
    %1346 = vmatpush1.msra.mxu0 0.0
    %1347 = vmatprep.subr.mxu0 0.0
    %1348 = vmatpush1.msra.mxu0 0.0
    %1349 = vmatprep.subr.mxu0 0.0
    %1350 = vmatpush1.msra.mxu0 0.0
    %1351 = vmatprep.subr.mxu0 0.0
    %1352 = vmatpush1.msra.mxu0 0.0
    %1353 = vmatprep.subr.mxu0 0.0
    %1354 = vmatpush1.msra.mxu0 0.0
    %1355 = vmatprep.subr.mxu0 0.0
    %1356 = vmatpush1.msra.mxu0 0.0
    %1357 = vmatprep.subr.mxu0 0.0
    %1358 = vmatpush1.msra.mxu0 0.0
    %1359 = vmatprep.subr.mxu0 0.0
    %1360 = vmatpush1.msra.mxu0 0.0
    %1361 = vmatprep.subr.mxu0 0.0
    %1362 = vmatpush1.msra.mxu0 0.0
    %1363 = vmatprep.subr.mxu0 0.0
    %1364 = vmatpush1.msra.mxu0 0.0
    %1365 = vmatprep.subr.mxu0 0.0
    %1366 = vmatpush1.msra.mxu0 0.0
    %1367 = vmatprep.subr.mxu0 0.0
    %1368 = vmatpush1.msra.mxu0 0.0
    %1369 = vmatprep.subr.mxu0 0.0
    %1370 = vmatpush1.msra.mxu0 0.0
    %1371 = vmatprep.subr.mxu0 0.0
    %1372 = vmatpush1.msra.mxu0 0.0
    %1373 = vmatprep.subr.mxu0 0.0
    %1374 = vmatpush1.msra.mxu0 0.0
    %1375 = vmatprep.subr.mxu0 0.0
    %1376 = vmatpush1.msra.mxu0 0.0
    %1377 = vmatprep.subr.mxu0 0.0
    %1378 = vmatpush1.msra.mxu0 0.0
    %1379 = vmatprep.subr.mxu0 0.0
    %1380 = vmatpush1.msra.mxu0 0.0
    %1381 = vmatprep.subr.mxu0 0.0
    %1382 = vmatpush1.msra.mxu0 0.0
    %1383 = vmatprep.subr.mxu0 0.0
    %1384 = vmatpush1.msra.mxu0 0.0
    %1385 = vmatprep.subr.mxu0 0.0
    %1386 = vmatpush1.msra.mxu0 0.0
    %1387 = vmatprep.subr.mxu0 0.0
    %1388 = vmatpush1.msra.mxu0 0.0
    %1389 = vmatprep.subr.mxu0 0.0
    %1390 = vmatpush1.msra.mxu0 0.0
    %1391 = vmatprep.subr.mxu0 0.0
    %1392 = vmatpush1.msra.mxu0 0.0
    %1393 = vmatprep.subr.mxu0 0.0
    %1394 = vmatpush1.msra.mxu0 0.0
    %1395 = vmatprep.subr.mxu0 0.0
    %1396 = vmatpush1.msra.mxu0 0.0
    %1397 = vmatprep.subr.mxu0 0.0
    %1398 = vmatpush1.msra.mxu0 0.0
    %1399 = vmatprep.subr.mxu0 0.0
    %1400 = vmatpush1.msra.mxu0 0.0
    %1401 = vmatprep.subr.mxu0 0.0
    %1402 = vmatpush1.msra.mxu0 0.0
    %1403 = vmatprep.subr.mxu0 0.0
    %1404 = vmatpush1.msra.mxu0 0.0
    %1405 = vmatprep.mubr.f32.mxu0 0.0
    %1406 = vmatmul.mubr.f32.gmra.mrb[0].mxu0 %v1339
    %v1407 = vpop.f32.mrb[0].mxu0
    %v1408 = vadd.f32 0.0, %v1407
    %v1409 = vpop.f32.mrb[0].mxu0
    %1410 = vdwg.mxu0
    %v1412 = vsel %vm156, %v1337, 0
    %1414 = vmatprep.subr.mxu0 0.0
    %1415 = vmatpush1.msra.mxu0 %v413
    %1416 = vmatprep.subr.mxu0 0.0
    %1417 = vmatpush1.msra.mxu0 0.0
    %1418 = vmatprep.subr.mxu0 0.0
    %1419 = vmatpush1.msra.mxu0 0.0
    %1420 = vmatprep.subr.mxu0 0.0
    %1421 = vmatpush1.msra.mxu0 0.0
    %1422 = vmatprep.subr.mxu0 0.0
    %1423 = vmatpush1.msra.mxu0 0.0
    %1424 = vmatprep.subr.mxu0 0.0
    %1425 = vmatpush1.msra.mxu0 0.0
    %1426 = vmatprep.subr.mxu0 0.0
    %1427 = vmatpush1.msra.mxu0 0.0
    %1428 = vmatprep.subr.mxu0 0.0
    %1429 = vmatpush1.msra.mxu0 0.0
    %1430 = vmatprep.subr.mxu0 0.0
    %1431 = vmatpush1.msra.mxu0 0.0
    %1432 = vmatprep.subr.mxu0 0.0
    %1433 = vmatpush1.msra.mxu0 0.0
    %1434 = vmatprep.subr.mxu0 0.0
    %1435 = vmatpush1.msra.mxu0 0.0
    %1436 = vmatprep.subr.mxu0 0.0
    %1437 = vmatpush1.msra.mxu0 0.0
    %1438 = vmatprep.subr.mxu0 0.0
    %1439 = vmatpush1.msra.mxu0 0.0
    %1440 = vmatprep.subr.mxu0 0.0
    %1441 = vmatpush1.msra.mxu0 0.0
    %1442 = vmatprep.subr.mxu0 0.0
    %1443 = vmatpush1.msra.mxu0 0.0
    %1444 = vmatprep.subr.mxu0 0.0
    %1445 = vmatpush1.msra.mxu0 0.0
    %1446 = vmatprep.subr.mxu0 0.0
    %1447 = vmatpush1.msra.mxu0 0.0
    %1448 = vmatprep.subr.mxu0 0.0
    %1449 = vmatpush1.msra.mxu0 0.0
    %1450 = vmatprep.subr.mxu0 0.0
    %1451 = vmatpush1.msra.mxu0 0.0
    %1452 = vmatprep.subr.mxu0 0.0
    %1453 = vmatpush1.msra.mxu0 0.0
    %1454 = vmatprep.subr.mxu0 0.0
    %1455 = vmatpush1.msra.mxu0 0.0
    %1456 = vmatprep.subr.mxu0 0.0
    %1457 = vmatpush1.msra.mxu0 0.0
    %1458 = vmatprep.subr.mxu0 0.0
    %1459 = vmatpush1.msra.mxu0 0.0
    %1460 = vmatprep.subr.mxu0 0.0
    %1461 = vmatpush1.msra.mxu0 0.0
    %1462 = vmatprep.subr.mxu0 0.0
    %1463 = vmatpush1.msra.mxu0 0.0
    %1464 = vmatprep.subr.mxu0 0.0
    %1465 = vmatpush1.msra.mxu0 0.0
    %1466 = vmatprep.subr.mxu0 0.0
    %1467 = vmatpush1.msra.mxu0 0.0
    %1468 = vmatprep.subr.mxu0 0.0
    %1469 = vmatpush1.msra.mxu0 0.0
    %1470 = vmatprep.subr.mxu0 0.0
    %1471 = vmatpush1.msra.mxu0 0.0
    %1472 = vmatprep.subr.mxu0 0.0
    %1473 = vmatpush1.msra.mxu0 0.0
    %1474 = vmatprep.subr.mxu0 0.0
    %1475 = vmatpush1.msra.mxu0 0.0
    %1476 = vmatprep.subr.mxu0 0.0
    %1477 = vmatpush1.msra.mxu0 0.0
    %1478 = vmatprep.mubr.f32.mxu0 0.0
    %1479 = vmatmul.mubr.f32.gmra.mrb[0].mxu0 %v1412
    %v1480 = vpop.f32.mrb[0].mxu0
    %v1481 = vadd.f32 0.0, %v1480
    %v1482 = vpop.f32.mrb[0].mxu0
    %1483 = vdwg.mxu0
    %v1484 = vadd.f32 %v1152, %v1408
    %v1485 = vadd.f32 %v1153, %v1481
    %1488 = vrot.lane.b32.xlu0 %v744, 8
    %v1489 = vpop.permute.xlu0 %1488
    %1490 = vrot.lane.b32.xlu0 %v817, 8
    %v1491 = vpop.permute.xlu0 %1490
    %1496 = vrot.lane.b32.xlu0 %v1076, 16
    %v1497 = vpop.permute.xlu0 %1496
    %1498 = vrot.lane.b32.xlu0 %v1149, 16
    %v1499 = vpop.permute.xlu0 %1498
    %1504 = vrot.lane.b32.xlu0 %v1408, 24
    %v1505 = vpop.permute.xlu0 %1504
    %1506 = vrot.lane.b32.xlu0 %v1481, 24
    %v1507 = vpop.permute.xlu0 %1506
    %v1510 = vsel %vm156, %v409, %v1489
    %v1511 = vsel %vm156, %v485, %v1491
    %vm1512 = vcmask 130048
    %v1513 = vsel %vm1512, %v1510, %v1497
    %v1514 = vsel %vm1512, %v1511, %v1499
    %vm1515 = vcmask 195584
    %v1516 = vsel %vm1515, %v1513, %v1505
    %v1517 = vsel %vm1515, %v1514, %v1507
    %1518 = vst.msk [vmem:[#allocation8] sm:$0xff] %vm65, %v1516
    %1519 = vst.msk [vmem:[#allocation8 + $0x8] sm:$0xff] %vm65, %v1517
    %v1520 = vld [vmem:[%s3] sm:$0xff]
    %v1521 = vld [vmem:[%s4] sm:$0x1]
    %v1523 = vlaneseq
    %v1524 = vshrl.u32 %v1523, 7
    %v1525 = vsub.s32 0, %v1524
    %v1526 = vrot.slane %v1521, %v1525
    %v1529 = vsel %vm156, %v1484, 0
    %v1532 = vsel %vm156, %v1485, 0
    %1534 = vmatprep.subr.mxu0 0.0
    %1535 = vmatpush1.msra.mxu0 %v1520
    %1536 = vmatprep.subr.mxu0 0.0
    %1537 = vmatpush1.msra.mxu0 0.0
    %1538 = vmatprep.subr.mxu0 0.0
    %1539 = vmatpush1.msra.mxu0 0.0
    %1540 = vmatprep.subr.mxu0 0.0
    %1541 = vmatpush1.msra.mxu0 0.0
    %1542 = vmatprep.subr.mxu0 0.0
    %1543 = vmatpush1.msra.mxu0 0.0
    %1544 = vmatprep.subr.mxu0 0.0
    %1545 = vmatpush1.msra.mxu0 0.0
    %1546 = vmatprep.subr.mxu0 0.0
    %1547 = vmatpush1.msra.mxu0 0.0
    %1548 = vmatprep.subr.mxu0 0.0
    %1549 = vmatpush1.msra.mxu0 0.0
    %1550 = vmatprep.subr.mxu0 0.0
    %1551 = vmatpush1.msra.mxu0 0.0
    %1552 = vmatprep.subr.mxu0 0.0
    %1553 = vmatpush1.msra.mxu0 0.0
    %1554 = vmatprep.subr.mxu0 0.0
    %1555 = vmatpush1.msra.mxu0 0.0
    %1556 = vmatprep.subr.mxu0 0.0
    %1557 = vmatpush1.msra.mxu0 0.0
    %1558 = vmatprep.subr.mxu0 0.0
    %1559 = vmatpush1.msra.mxu0 0.0
    %1560 = vmatprep.subr.mxu0 0.0
    %1561 = vmatpush1.msra.mxu0 0.0
    %1562 = vmatprep.subr.mxu0 0.0
    %1563 = vmatpush1.msra.mxu0 0.0
    %1564 = vmatprep.subr.mxu0 0.0
    %1565 = vmatpush1.msra.mxu0 0.0
    %1566 = vmatprep.subr.mxu0 0.0
    %1567 = vmatpush1.msra.mxu0 0.0
    %1568 = vmatprep.subr.mxu0 0.0
    %1569 = vmatpush1.msra.mxu0 0.0
    %1570 = vmatprep.subr.mxu0 0.0
    %1571 = vmatpush1.msra.mxu0 0.0
    %1572 = vmatprep.subr.mxu0 0.0
    %1573 = vmatpush1.msra.mxu0 0.0
    %1574 = vmatprep.subr.mxu0 0.0
    %1575 = vmatpush1.msra.mxu0 0.0
    %1576 = vmatprep.subr.mxu0 0.0
    %1577 = vmatpush1.msra.mxu0 0.0
    %1578 = vmatprep.subr.mxu0 0.0
    %1579 = vmatpush1.msra.mxu0 0.0
    %1580 = vmatprep.subr.mxu0 0.0
    %1581 = vmatpush1.msra.mxu0 0.0
    %1582 = vmatprep.subr.mxu0 0.0
    %1583 = vmatpush1.msra.mxu0 0.0
    %1584 = vmatprep.subr.mxu0 0.0
    %1585 = vmatpush1.msra.mxu0 0.0
    %1586 = vmatprep.subr.mxu0 0.0
    %1587 = vmatpush1.msra.mxu0 0.0
    %1588 = vmatprep.subr.mxu0 0.0
    %1589 = vmatpush1.msra.mxu0 0.0
    %1590 = vmatprep.subr.mxu0 0.0
    %1591 = vmatpush1.msra.mxu0 0.0
    %1592 = vmatprep.subr.mxu0 0.0
    %1593 = vmatpush1.msra.mxu0 0.0
    %1594 = vmatprep.subr.mxu0 0.0
    %1595 = vmatpush1.msra.mxu0 0.0
    %1596 = vmatprep.subr.mxu0 0.0
    %1597 = vmatpush1.msra.mxu0 0.0
    %1598 = vmatprep.mubr.f32.mxu0 0.0
    %1599 = vmatmul.mubr.f32.gmra.mrb[0].mxu0 %v1529
    %v1600 = vpop.f32.mrb[0].mxu0
    %v1601 = vadd.f32 %v1526, %v1600
    %v1602 = vpop.f32.mrb[0].mxu0
    %1603 = vmatprep.mubr.f32.mxu0 0.0
    %1604 = vmatmul.mubr.f32.gmra.mrb[0].mxu0 %v1532
    %v1605 = vpop.f32.mrb[0].mxu0
    %v1606 = vadd.f32 %v1526, %v1605
    %v1607 = vpop.f32.mrb[0].mxu0
    %1608 = vdwg.mxu0
    %1609 = vst.msk [vmem:[#allocation7] sm:$0xff] %vm65, %v1601
    %1610 = vst.msk [vmem:[#allocation7 + $0x8] sm:$0xff] %vm65, %v1606
    // Predicated region
    $region30: #{tpu_custom_call.1} parent=1 // pred_check
      _
    $region31: #{tpu_custom_call.1} parent=1 // pred_check_branch
      %1612 = sbr.rel (0) target = $region33
    $region32: #{tpu_custom_call.1} parent=1 // pred_region
      %s1614 = ssub.s32 256, 256
      %1615 = vsyncadd [#allocation4], %s1614
      %s1616 = sshll.u32 [#allocation7], 4
      %s1617 = int_to_ptr.vmem [resolvable:$true] %s1616
      %1622 = dma.vmem_to_hbm [thread:$0]  %s1617, 256, %s5, [#allocation4], 128, 128, 8
    $region33: #{tpu_custom_call.1} parent=1 // pred_fallthru
      _
    // Predicated region
    $region34: #{tpu_custom_call.1} parent=1 // pred_check
      _
    $region35: #{tpu_custom_call.1} parent=1 // pred_check_branch
      %1624 = sbr.rel (0) target = $region37
    $region36: #{tpu_custom_call.1} parent=1 // pred_region
      %s1626 = ssub.s32 256, 256
      %1627 = vsyncadd [#allocation9], %s1626
      %s1628 = sshll.u32 [#allocation8], 4
      %s1629 = int_to_ptr.vmem [resolvable:$true] %s1628
      %1634 = dma.vmem_to_hbm [thread:$0]  %s1629, 256, %s6, [#allocation9], 128, 128, 8
    $region37: #{tpu_custom_call.1} parent=1 // pred_fallthru
      _
    // Predicated region
    $region38: #{tpu_custom_call.1} parent=1 // pred_check
      _
    $region39: #{tpu_custom_call.1} parent=1 // pred_check_branch
      %1636 = sbr.rel (0) target = $region41
    $region40: #{tpu_custom_call.1} parent=1 // pred_region
      %1637 = dma.done [#allocation4], 256
    $region41: #{tpu_custom_call.1} parent=1 // pred_fallthru
      _
    // Predicated region
    $region42: #{tpu_custom_call.1} parent=1 // pred_check
      _
    $region43: #{tpu_custom_call.1} parent=1 // pred_check_branch
      %1639 = sbr.rel (0) target = $region45
    $region44: #{tpu_custom_call.1} parent=1 // pred_region
      %1640 = dma.done [#allocation9], 256
    $region45: #{tpu_custom_call.1} parent=1 // pred_fallthru
      _
    %1641 = vsyncpa [#allocation3], 1
    %1642 = vsyncpa [#allocation6], 1
    %1643 = vsyncpa [#allocation4], 1
    %1644 = vsyncpa [#allocation9], 1

</llo_original>
